<compile_context>
chip_gen: v5e
topology: v5e:2x2
jax: 0.10.0
libtpu: 0.0.40
codegen_flags: <defaults>
</compile_context>

<pallas_src>
import functools
import math

import jax
import jax.numpy as jnp
from jax import lax
from jax.experimental import pallas as pl
from jax.experimental.pallas import tpu as pltpu


# --------------------------------------------------------------------------
# Fused kernel: QKV proj -> per-head softmax attention -> output proj
#               -> residual add -> LayerNorm, all in VMEM.
# --------------------------------------------------------------------------
def _fused_bert_attention_kernel(
    x_ref,        # (B*S, D)      flattened hidden states
    wqkv_ref,     # (D, 3D)       packed [Wq | Wk | Wv] (stored as in x out)
    bqkv_ref,     # (1, 3D)       packed [bq | bk | bv]
    wo_ref,       # (D, D)        output dense weight
    bo_ref,       # (1, D)        output dense bias
    g_ref,        # (1, D)        LayerNorm gamma
    beta_ref,     # (1, D)        LayerNorm beta
    mask_ref,     # (B, S)        additive attention mask (0 / -10000)
    o_ref,        # (B*S, D)      output
    ctx_ref,      # (B*S, D)      VMEM scratch for the context layer
    *, B, S, NH, Dh, scale, eps,
):
    D = NH * Dh
    x = x_ref[...]                                                # (B*S, D)

    # ---- single wide QKV projection: one MXU pass for all of Q, K, V ----
    qkv = (
        jnp.dot(x, wqkv_ref[...], preferred_element_type=jnp.float32)
        + bqkv_ref[...]
    )                                                             # (B*S, 3D)

    mask = mask_ref[...]                                          # (B, S)

    # ---- attention core, all heads/batches inside this single grid step ----
    for b in range(B):                # static loops (B=2, NH=4): fully unrolled
        r0 = b * S
        m_b = mask[b:b + 1, :]                                    # (1, S) bcast over query rows
        for h in range(NH):
            c0 = h * Dh
            q = qkv[r0:r0 + S, c0:c0 + Dh]                        # (S, Dh)
            k = qkv[r0:r0 + S, D + c0:D + c0 + Dh]                # (S, Dh)
            v = qkv[r0:r0 + S, 2 * D + c0:2 * D + c0 + Dh]        # (S, Dh)

            # scores = q @ k^T / sqrt(Dh) + mask   (contract last dims, no transpose op)
            s = lax.dot_general(
                q, k, (((1,), (1,)), ((), ())),
                preferred_element_type=jnp.float32,
            )                                                     # (S, S)
            s = s * scale + m_b
            s = s - jnp.max(s, axis=-1, keepdims=True)
            p = jnp.exp(s)
            # EUP reciprocal instead of a VPU divide
            p = p * pl.reciprocal(jnp.sum(p, axis=-1, keepdims=True), approx=True)
            # TODO(synk): attention_probs dropout is identity at inference (p=0);
            #             head_mask is None in this path.

            ctx_ref[r0:r0 + S, c0:c0 + Dh] = jnp.dot(
                p, v, preferred_element_type=jnp.float32
            )                                                     # (S, Dh)

    ctx = ctx_ref[...]                                            # (B*S, D)

    # ---- BertSelfOutput: dense -> (dropout identity) -> LayerNorm(x + residual) ----
    dense = (
        jnp.dot(ctx, wo_ref[...], preferred_element_type=jnp.float32)
        + bo_ref[...]
    )
    y = dense + x
    mu = jnp.mean(y, axis=-1, keepdims=True)
    var = jnp.mean((y - mu) ** 2, axis=-1, keepdims=True)
    o_ref[...] = ((y - mu) * lax.rsqrt(var + eps)) * g_ref[...] + beta_ref[...]


def _fused_bert_attention(x2, wqkv, bqkv, wo, bo, ln_g, ln_b, mask2,
                          *, B, S, NH, Dh, eps=1e-12):
    D = NH * Dh
    M = B * S
    kern = functools.partial(
        _fused_bert_attention_kernel,
        B=B, S=S, NH=NH, Dh=Dh, scale=1.0 / math.sqrt(Dh), eps=eps,
    )
    return pl.pallas_call(
        kern,
        out_shape=jax.ShapeDtypeStruct((M, D), jnp.float32),
        grid=(1,),
        in_specs=[
            pl.BlockSpec((M, D), lambda i: (0, 0)),        # x
            pl.BlockSpec((D, 3 * D), lambda i: (0, 0)),    # W_qkv
            pl.BlockSpec((1, 3 * D), lambda i: (0, 0)),    # b_qkv
            pl.BlockSpec((D, D), lambda i: (0, 0)),        # W_o
            pl.BlockSpec((1, D), lambda i: (0, 0)),        # b_o
            pl.BlockSpec((1, D), lambda i: (0, 0)),        # ln gamma
            pl.BlockSpec((1, D), lambda i: (0, 0)),        # ln beta
            pl.BlockSpec((B, S), lambda i: (0, 0)),        # additive mask
        ],
        out_specs=pl.BlockSpec((M, D), lambda i: (0, 0)),
        scratch_shapes=[pltpu.VMEM((M, D), jnp.float32)],
    )(
        x2, wqkv, bqkv.reshape(1, 3 * D), wo, bo.reshape(1, D),
        ln_g.reshape(1, D), ln_b.reshape(1, D), mask2,
    )


# --------------------------------------------------------------------------
# BertAttention forward (flatten_image=True path of the PyTorch module)
# --------------------------------------------------------------------------
@functools.partial(jax.jit, static_argnames=("num_heads",))
def bert_attention_forward(params, input_tensor, attention_mask, num_heads):
    is_image = input_tensor.ndim == 4
    if is_image:
        B, W, H, D = input_tensor.shape
        x = input_tensor.reshape(B, W * H, D)
    else:
        x = input_tensor
    B, S, D = x.shape
    head_dim = D // num_heads

    x2 = x.reshape(B * S, D)

    # Pack Q/K/V weights once (constant-folded under jit): (D, 3D), (3D,)
    wqkv = jnp.concatenate([params["wq"], params["wk"], params["wv"]], axis=1)
    bqkv = jnp.concatenate([params["bq"], params["bk"], params["bv"]], axis=0)

    # BERT additive mask (B, 1, 1, S) -> (B, S)
    mask2 = attention_mask.astype(jnp.float32).reshape(B, S)

    out2 = _fused_bert_attention(
        x2, wqkv, bqkv, params["wo"], params["bo"],
        params["ln_g"], params["ln_b"], mask2,
        B=B, S=S, NH=num_heads, Dh=head_dim,
    )

    out = out2.reshape(B, S, D)
    if is_image:
        out = out.reshape(B, W, H, D)
    return out


# --------------------------------------------------------------------------
# Pure-JAX reference (mirrors the PyTorch forward) for a sanity check
# --------------------------------------------------------------------------
def bert_attention_reference(params, input_tensor, attention_mask, num_heads):
    B, W, H, D = input_tensor.shape
    S = W * H
    Dh = D // num_heads
    x = input_tensor.reshape(B, S, D)

    def lin(t, w, b):
        return t @ w + b

    q = lin(x, params["wq"], params["bq"]).reshape(B, S, num_heads, Dh).transpose(0, 2, 1, 3)
    k = lin(x, params["wk"], params["bk"]).reshape(B, S, num_heads, Dh).transpose(0, 2, 1, 3)
    v = lin(x, params["wv"], params["bv"]).reshape(B, S, num_heads, Dh).transpose(0, 2, 1, 3)

    s = jnp.einsum("bhqd,bhkd->bhqk", q, k) / math.sqrt(Dh)
    s = s + attention_mask.astype(jnp.float32)
    p = jax.nn.softmax(s, axis=-1)
    ctx = jnp.einsum("bhqk,bhkd->bhqd", p, v).transpose(0, 2, 1, 3).reshape(B, S, D)

    dense = lin(ctx, params["wo"], params["bo"])
    y = dense + x
    mu = jnp.mean(y, axis=-1, keepdims=True)
    var = jnp.mean((y - mu) ** 2, axis=-1, keepdims=True)
    out = (y - mu) / jnp.sqrt(var + 1e-12) * params["ln_g"] + params["ln_b"]
    return out.reshape(B, W, H, D)


# --------------------------------------------------------------------------
# Deterministic parameter initialization (shapes from the module's __init__)
# --------------------------------------------------------------------------
def init_params(key, hidden):
    keys = jax.random.split(key, 8)
    std = 0.02
    return {
        # weights stored as (in, out) = PyTorch weight.T
        "wq": std * jax.random.normal(keys[0], (hidden, hidden), jnp.float32),
        "bq": std * jax.random.normal(keys[1], (hidden,), jnp.float32),
        "wk": std * jax.random.normal(keys[2], (hidden, hidden), jnp.float32),
        "bk": std * jax.random.normal(keys[3], (hidden,), jnp.float32),
        "wv": std * jax.random.normal(keys[4], (hidden, hidden), jnp.float32),
        "bv": std * jax.random.normal(keys[5], (hidden,), jnp.float32),
        "wo": std * jax.random.normal(keys[6], (hidden, hidden), jnp.float32),
        "bo": std * jax.random.normal(keys[7], (hidden,), jnp.float32),
        "ln_g": jnp.ones((hidden,), jnp.float32),
        "ln_b": jnp.zeros((hidden,), jnp.float32),
    }


if __name__ == "__main__":
    B, W, H, D, NH = 2, 4, 4, 32, 4
    S = W * H

    root = jax.random.PRNGKey(0)
    k_params, k_x = jax.random.split(root)

    params = init_params(k_params, D)
    x = jax.random.normal(k_x, (B, W, H, D), dtype=jnp.float32)

    # BERT-style additive mask: 0 = keep, -10000 = masked. Mask last 3 positions
    # of the second batch element so the mask path is exercised.
    keep = jnp.ones((B, S), jnp.float32).at[1, S - 3:].set(0.0)
    attention_mask = ((1.0 - keep) * -10000.0).reshape(B, 1, 1, S)

    out = bert_attention_forward(params, x, attention_mask, NH)
    jax.block_until_ready(out)
    assert out.shape == (B, W, H, D)

    ref = bert_attention_reference(params, x, attention_mask, NH)
    assert jnp.allclose(out, ref, atol=1e-2, rtol=1e-2), "mismatch vs reference"

    print("KERNEL_OK")
</pallas_src>

<mosaic_0001>
module attributes {stable_mosaic.version = 11 : i64} {
  func.func @_fused_bert_attention_kernel(%arg0: i32, %arg1: memref<32x32xf32, #tpu.memory_space<vmem>>, %arg2: memref<32x96xf32, #tpu.memory_space<vmem>>, %arg3: memref<1x96xf32, #tpu.memory_space<vmem>>, %arg4: memref<32x32xf32, #tpu.memory_space<vmem>>, %arg5: memref<1x32xf32, #tpu.memory_space<vmem>>, %arg6: memref<1x32xf32, #tpu.memory_space<vmem>>, %arg7: memref<1x32xf32, #tpu.memory_space<vmem>>, %arg8: memref<2x16xf32, #tpu.memory_space<vmem>>, %arg9: memref<32x32xf32, #tpu.memory_space<vmem>>, %arg10: memref<32x32xf32, #tpu.memory_space<vmem>>) attributes {dimension_semantics = [#tpu.dimension_semantics<arbitrary>], iteration_bounds = array<i64: 1>, scalar_prefetch = 0 : i64, scratch_operands = 1 : i64, tpu.core_type = #tpu.core_type<tc>, window_params = [{pipeline_mode = #tpu.pipeline_mode<synchronous>, transform_indices = @transform_0, window_bounds = array<i64: 32, 32>}, {pipeline_mode = #tpu.pipeline_mode<synchronous>, transform_indices = @transform_1, window_bounds = array<i64: 32, 96>}, {pipeline_mode = #tpu.pipeline_mode<synchronous>, transform_indices = @transform_2, window_bounds = array<i64: 1, 96>}, {pipeline_mode = #tpu.pipeline_mode<synchronous>, transform_indices = @transform_3, window_bounds = array<i64: 32, 32>}, {pipeline_mode = #tpu.pipeline_mode<synchronous>, transform_indices = @transform_4, window_bounds = array<i64: 1, 32>}, {pipeline_mode = #tpu.pipeline_mode<synchronous>, transform_indices = @transform_5, window_bounds = array<i64: 1, 32>}, {pipeline_mode = #tpu.pipeline_mode<synchronous>, transform_indices = @transform_6, window_bounds = array<i64: 1, 32>}, {pipeline_mode = #tpu.pipeline_mode<synchronous>, transform_indices = @transform_7, window_bounds = array<i64: 2, 16>}, {pipeline_mode = #tpu.pipeline_mode<synchronous>, transform_indices = @transform_8, window_bounds = array<i64: 32, 32>}]} {
    %c0 = arith.constant 0 : index
    %c0_0 = arith.constant 0 : index
    %0 = vector.load %arg1[%c0, %c0_0] : memref<32x32xf32, #tpu.memory_space<vmem>>, vector<32x32xf32>
    %c0_1 = arith.constant 0 : index
    %c0_2 = arith.constant 0 : index
    %1 = vector.load %arg2[%c0_1, %c0_2] : memref<32x96xf32, #tpu.memory_space<vmem>>, vector<32x96xf32>
    %cst = arith.constant dense<0.000000e+00> : vector<32x96xf32>
    %2 = tpu.matmul %0, %1, %cst {dimension_numbers = #tpu.dot_dimension_numbers<[1], [0], [0], [1], [0, 0, 1, 1], [], []>} : vector<32x32xf32>, vector<32x96xf32>, vector<32x96xf32> -> vector<32x96xf32>
    %c0_3 = arith.constant 0 : index
    %c0_4 = arith.constant 0 : index
    %3 = vector.load %arg3[%c0_3, %c0_4] : memref<1x96xf32, #tpu.memory_space<vmem>>, vector<1x96xf32>
    %4 = vector.broadcast %3 : vector<1x96xf32> to vector<32x96xf32>
    %5 = arith.addf %2, %4 : vector<32x96xf32>
    %c0_5 = arith.constant 0 : index
    %c0_6 = arith.constant 0 : index
    %6 = vector.load %arg8[%c0_5, %c0_6] : memref<2x16xf32, #tpu.memory_space<vmem>>, vector<2x16xf32>
    %7 = vector.extract_strided_slice %6 {offsets = [0, 0], sizes = [1, 16], strides = [1, 1]} : vector<2x16xf32> to vector<1x16xf32>
    %8 = vector.extract_strided_slice %5 {offsets = [0, 0], sizes = [16, 8], strides = [1, 1]} : vector<32x96xf32> to vector<16x8xf32>
    %9 = vector.extract_strided_slice %5 {offsets = [0, 32], sizes = [16, 8], strides = [1, 1]} : vector<32x96xf32> to vector<16x8xf32>
    %10 = vector.extract_strided_slice %5 {offsets = [0, 64], sizes = [16, 8], strides = [1, 1]} : vector<32x96xf32> to vector<16x8xf32>
    %cst_7 = arith.constant dense<0.000000e+00> : vector<16x16xf32>
    %11 = tpu.matmul %8, %9, %cst_7 {dimension_numbers = #tpu.dot_dimension_numbers<[1], [1], [0], [0], [0, 0, 1, 0], [], []>} : vector<16x8xf32>, vector<16x8xf32>, vector<16x16xf32> -> vector<16x16xf32>
    %cst_8 = arith.constant 0.353553385 : f32
    %12 = vector.broadcast %cst_8 : f32 to vector<16x16xf32>
    %13 = arith.mulf %11, %12 : vector<16x16xf32>
    %14 = vector.broadcast %7 : vector<1x16xf32> to vector<16x16xf32>
    %15 = arith.addf %13, %14 : vector<16x16xf32>
    %cst_9 = arith.constant dense<0xFF800000> : vector<16xf32>
    %16 = vector.multi_reduction <maximumf>, %15, %cst_9 [1] : vector<16x16xf32> to vector<16xf32>
    %17 = vector.shape_cast %16 : vector<16xf32> to vector<16x1xf32>
    %18 = vector.broadcast %17 : vector<16x1xf32> to vector<16x16xf32>
    %19 = arith.subf %15, %18 : vector<16x16xf32>
    %20 = math.exp %19 : vector<16x16xf32>
    %cst_10 = arith.constant dense<0.000000e+00> : vector<16xf32>
    %21 = vector.multi_reduction <add>, %20, %cst_10 [1] : vector<16x16xf32> to vector<16xf32>
    %22 = vector.shape_cast %21 : vector<16xf32> to vector<16x1xf32>
    %23 = tpu.reciprocal %22 {approx = true} : vector<16x1xf32> -> vector<16x1xf32>
    %24 = vector.broadcast %23 : vector<16x1xf32> to vector<16x16xf32>
    %25 = arith.mulf %20, %24 : vector<16x16xf32>
    %cst_11 = arith.constant dense<0.000000e+00> : vector<16x8xf32>
    %26 = tpu.matmul %25, %10, %cst_11 {dimension_numbers = #tpu.dot_dimension_numbers<[1], [0], [0], [1], [0, 0, 1, 1], [], []>} : vector<16x16xf32>, vector<16x8xf32>, vector<16x8xf32> -> vector<16x8xf32>
    %c0_12 = arith.constant 0 : index
    %c0_13 = arith.constant 0 : index
    %27 = vector.load %arg10[%c0_12, %c0_13] : memref<32x32xf32, #tpu.memory_space<vmem>>, vector<16x8xf32>
    tpu.vector_store %arg10[%c0_12, %c0_13], %26 {strides = array<i32>} : memref<32x32xf32, #tpu.memory_space<vmem>>, vector<16x8xf32>,
    %28 = vector.extract_strided_slice %5 {offsets = [0, 8], sizes = [16, 8], strides = [1, 1]} : vector<32x96xf32> to vector<16x8xf32>
    %29 = vector.extract_strided_slice %5 {offsets = [0, 40], sizes = [16, 8], strides = [1, 1]} : vector<32x96xf32> to vector<16x8xf32>
    %30 = vector.extract_strided_slice %5 {offsets = [0, 72], sizes = [16, 8], strides = [1, 1]} : vector<32x96xf32> to vector<16x8xf32>
    %cst_14 = arith.constant dense<0.000000e+00> : vector<16x16xf32>
    %31 = tpu.matmul %28, %29, %cst_14 {dimension_numbers = #tpu.dot_dimension_numbers<[1], [1], [0], [0], [0, 0, 1, 0], [], []>} : vector<16x8xf32>, vector<16x8xf32>, vector<16x16xf32> -> vector<16x16xf32>
    %cst_15 = arith.constant 0.353553385 : f32
    %32 = vector.broadcast %cst_15 : f32 to vector<16x16xf32>
    %33 = arith.mulf %31, %32 : vector<16x16xf32>
    %34 = vector.broadcast %7 : vector<1x16xf32> to vector<16x16xf32>
    %35 = arith.addf %33, %34 : vector<16x16xf32>
    %cst_16 = arith.constant dense<0xFF800000> : vector<16xf32>
    %36 = vector.multi_reduction <maximumf>, %35, %cst_16 [1] : vector<16x16xf32> to vector<16xf32>
    %37 = vector.shape_cast %36 : vector<16xf32> to vector<16x1xf32>
    %38 = vector.broadcast %37 : vector<16x1xf32> to vector<16x16xf32>
    %39 = arith.subf %35, %38 : vector<16x16xf32>
    %40 = math.exp %39 : vector<16x16xf32>
    %cst_17 = arith.constant dense<0.000000e+00> : vector<16xf32>
    %41 = vector.multi_reduction <add>, %40, %cst_17 [1] : vector<16x16xf32> to vector<16xf32>
    %42 = vector.shape_cast %41 : vector<16xf32> to vector<16x1xf32>
    %43 = tpu.reciprocal %42 {approx = true} : vector<16x1xf32> -> vector<16x1xf32>
    %44 = vector.broadcast %43 : vector<16x1xf32> to vector<16x16xf32>
    %45 = arith.mulf %40, %44 : vector<16x16xf32>
    %cst_18 = arith.constant dense<0.000000e+00> : vector<16x8xf32>
    %46 = tpu.matmul %45, %30, %cst_18 {dimension_numbers = #tpu.dot_dimension_numbers<[1], [0], [0], [1], [0, 0, 1, 1], [], []>} : vector<16x16xf32>, vector<16x8xf32>, vector<16x8xf32> -> vector<16x8xf32>
    %c0_19 = arith.constant 0 : index
    %c8 = arith.constant 8 : index
    %47 = vector.load %arg10[%c0_19, %c8] : memref<32x32xf32, #tpu.memory_space<vmem>>, vector<16x8xf32>
    tpu.vector_store %arg10[%c0_19, %c8], %46 {strides = array<i32>} : memref<32x32xf32, #tpu.memory_space<vmem>>, vector<16x8xf32>,
    %48 = vector.extract_strided_slice %5 {offsets = [0, 16], sizes = [16, 8], strides = [1, 1]} : vector<32x96xf32> to vector<16x8xf32>
    %49 = vector.extract_strided_slice %5 {offsets = [0, 48], sizes = [16, 8], strides = [1, 1]} : vector<32x96xf32> to vector<16x8xf32>
    %50 = vector.extract_strided_slice %5 {offsets = [0, 80], sizes = [16, 8], strides = [1, 1]} : vector<32x96xf32> to vector<16x8xf32>
    %cst_20 = arith.constant dense<0.000000e+00> : vector<16x16xf32>
    %51 = tpu.matmul %48, %49, %cst_20 {dimension_numbers = #tpu.dot_dimension_numbers<[1], [1], [0], [0], [0, 0, 1, 0], [], []>} : vector<16x8xf32>, vector<16x8xf32>, vector<16x16xf32> -> vector<16x16xf32>
    %cst_21 = arith.constant 0.353553385 : f32
    %52 = vector.broadcast %cst_21 : f32 to vector<16x16xf32>
    %53 = arith.mulf %51, %52 : vector<16x16xf32>
    %54 = vector.broadcast %7 : vector<1x16xf32> to vector<16x16xf32>
    %55 = arith.addf %53, %54 : vector<16x16xf32>
    %cst_22 = arith.constant dense<0xFF800000> : vector<16xf32>
    %56 = vector.multi_reduction <maximumf>, %55, %cst_22 [1] : vector<16x16xf32> to vector<16xf32>
    %57 = vector.shape_cast %56 : vector<16xf32> to vector<16x1xf32>
    %58 = vector.broadcast %57 : vector<16x1xf32> to vector<16x16xf32>
    %59 = arith.subf %55, %58 : vector<16x16xf32>
    %60 = math.exp %59 : vector<16x16xf32>
    %cst_23 = arith.constant dense<0.000000e+00> : vector<16xf32>
    %61 = vector.multi_reduction <add>, %60, %cst_23 [1] : vector<16x16xf32> to vector<16xf32>
    %62 = vector.shape_cast %61 : vector<16xf32> to vector<16x1xf32>
    %63 = tpu.reciprocal %62 {approx = true} : vector<16x1xf32> -> vector<16x1xf32>
    %64 = vector.broadcast %63 : vector<16x1xf32> to vector<16x16xf32>
    %65 = arith.mulf %60, %64 : vector<16x16xf32>
    %cst_24 = arith.constant dense<0.000000e+00> : vector<16x8xf32>
    %66 = tpu.matmul %65, %50, %cst_24 {dimension_numbers = #tpu.dot_dimension_numbers<[1], [0], [0], [1], [0, 0, 1, 1], [], []>} : vector<16x16xf32>, vector<16x8xf32>, vector<16x8xf32> -> vector<16x8xf32>
    %c0_25 = arith.constant 0 : index
    %c16 = arith.constant 16 : index
    %67 = vector.load %arg10[%c0_25, %c16] : memref<32x32xf32, #tpu.memory_space<vmem>>, vector<16x8xf32>
    tpu.vector_store %arg10[%c0_25, %c16], %66 {strides = array<i32>} : memref<32x32xf32, #tpu.memory_space<vmem>>, vector<16x8xf32>,
    %68 = vector.extract_strided_slice %5 {offsets = [0, 24], sizes = [16, 8], strides = [1, 1]} : vector<32x96xf32> to vector<16x8xf32>
    %69 = vector.extract_strided_slice %5 {offsets = [0, 56], sizes = [16, 8], strides = [1, 1]} : vector<32x96xf32> to vector<16x8xf32>
    %70 = vector.extract_strided_slice %5 {offsets = [0, 88], sizes = [16, 8], strides = [1, 1]} : vector<32x96xf32> to vector<16x8xf32>
    %cst_26 = arith.constant dense<0.000000e+00> : vector<16x16xf32>
    %71 = tpu.matmul %68, %69, %cst_26 {dimension_numbers = #tpu.dot_dimension_numbers<[1], [1], [0], [0], [0, 0, 1, 0], [], []>} : vector<16x8xf32>, vector<16x8xf32>, vector<16x16xf32> -> vector<16x16xf32>
    %cst_27 = arith.constant 0.353553385 : f32
    %72 = vector.broadcast %cst_27 : f32 to vector<16x16xf32>
    %73 = arith.mulf %71, %72 : vector<16x16xf32>
    %74 = vector.broadcast %7 : vector<1x16xf32> to vector<16x16xf32>
    %75 = arith.addf %73, %74 : vector<16x16xf32>
    %cst_28 = arith.constant dense<0xFF800000> : vector<16xf32>
    %76 = vector.multi_reduction <maximumf>, %75, %cst_28 [1] : vector<16x16xf32> to vector<16xf32>
    %77 = vector.shape_cast %76 : vector<16xf32> to vector<16x1xf32>
    %78 = vector.broadcast %77 : vector<16x1xf32> to vector<16x16xf32>
    %79 = arith.subf %75, %78 : vector<16x16xf32>
    %80 = math.exp %79 : vector<16x16xf32>
    %cst_29 = arith.constant dense<0.000000e+00> : vector<16xf32>
    %81 = vector.multi_reduction <add>, %80, %cst_29 [1] : vector<16x16xf32> to vector<16xf32>
    %82 = vector.shape_cast %81 : vector<16xf32> to vector<16x1xf32>
    %83 = tpu.reciprocal %82 {approx = true} : vector<16x1xf32> -> vector<16x1xf32>
    %84 = vector.broadcast %83 : vector<16x1xf32> to vector<16x16xf32>
    %85 = arith.mulf %80, %84 : vector<16x16xf32>
    %cst_30 = arith.constant dense<0.000000e+00> : vector<16x8xf32>
    %86 = tpu.matmul %85, %70, %cst_30 {dimension_numbers = #tpu.dot_dimension_numbers<[1], [0], [0], [1], [0, 0, 1, 1], [], []>} : vector<16x16xf32>, vector<16x8xf32>, vector<16x8xf32> -> vector<16x8xf32>
    %c0_31 = arith.constant 0 : index
    %c24 = arith.constant 24 : index
    %87 = vector.load %arg10[%c0_31, %c24] : memref<32x32xf32, #tpu.memory_space<vmem>>, vector<16x8xf32>
    tpu.vector_store %arg10[%c0_31, %c24], %86 {strides = array<i32>} : memref<32x32xf32, #tpu.memory_space<vmem>>, vector<16x8xf32>,
    %88 = vector.extract_strided_slice %6 {offsets = [1, 0], sizes = [1, 16], strides = [1, 1]} : vector<2x16xf32> to vector<1x16xf32>
    %89 = vector.extract_strided_slice %5 {offsets = [16, 0], sizes = [16, 8], strides = [1, 1]} : vector<32x96xf32> to vector<16x8xf32>
    %90 = vector.extract_strided_slice %5 {offsets = [16, 32], sizes = [16, 8], strides = [1, 1]} : vector<32x96xf32> to vector<16x8xf32>
    %91 = vector.extract_strided_slice %5 {offsets = [16, 64], sizes = [16, 8], strides = [1, 1]} : vector<32x96xf32> to vector<16x8xf32>
    %cst_32 = arith.constant dense<0.000000e+00> : vector<16x16xf32>
    %92 = tpu.matmul %89, %90, %cst_32 {dimension_numbers = #tpu.dot_dimension_numbers<[1], [1], [0], [0], [0, 0, 1, 0], [], []>} : vector<16x8xf32>, vector<16x8xf32>, vector<16x16xf32> -> vector<16x16xf32>
    %cst_33 = arith.constant 0.353553385 : f32
    %93 = vector.broadcast %cst_33 : f32 to vector<16x16xf32>
    %94 = arith.mulf %92, %93 : vector<16x16xf32>
    %95 = vector.broadcast %88 : vector<1x16xf32> to vector<16x16xf32>
    %96 = arith.addf %94, %95 : vector<16x16xf32>
    %cst_34 = arith.constant dense<0xFF800000> : vector<16xf32>
    %97 = vector.multi_reduction <maximumf>, %96, %cst_34 [1] : vector<16x16xf32> to vector<16xf32>
    %98 = vector.shape_cast %97 : vector<16xf32> to vector<16x1xf32>
    %99 = vector.broadcast %98 : vector<16x1xf32> to vector<16x16xf32>
    %100 = arith.subf %96, %99 : vector<16x16xf32>
    %101 = math.exp %100 : vector<16x16xf32>
    %cst_35 = arith.constant dense<0.000000e+00> : vector<16xf32>
    %102 = vector.multi_reduction <add>, %101, %cst_35 [1] : vector<16x16xf32> to vector<16xf32>
    %103 = vector.shape_cast %102 : vector<16xf32> to vector<16x1xf32>
    %104 = tpu.reciprocal %103 {approx = true} : vector<16x1xf32> -> vector<16x1xf32>
    %105 = vector.broadcast %104 : vector<16x1xf32> to vector<16x16xf32>
    %106 = arith.mulf %101, %105 : vector<16x16xf32>
    %cst_36 = arith.constant dense<0.000000e+00> : vector<16x8xf32>
    %107 = tpu.matmul %106, %91, %cst_36 {dimension_numbers = #tpu.dot_dimension_numbers<[1], [0], [0], [1], [0, 0, 1, 1], [], []>} : vector<16x16xf32>, vector<16x8xf32>, vector<16x8xf32> -> vector<16x8xf32>
    %c16_37 = arith.constant 16 : index
    %c0_38 = arith.constant 0 : index
    %108 = vector.load %arg10[%c16_37, %c0_38] : memref<32x32xf32, #tpu.memory_space<vmem>>, vector<16x8xf32>
    tpu.vector_store %arg10[%c16_37, %c0_38], %107 {strides = array<i32>} : memref<32x32xf32, #tpu.memory_space<vmem>>, vector<16x8xf32>,
    %109 = vector.extract_strided_slice %5 {offsets = [16, 8], sizes = [16, 8], strides = [1, 1]} : vector<32x96xf32> to vector<16x8xf32>
    %110 = vector.extract_strided_slice %5 {offsets = [16, 40], sizes = [16, 8], strides = [1, 1]} : vector<32x96xf32> to vector<16x8xf32>
    %111 = vector.extract_strided_slice %5 {offsets = [16, 72], sizes = [16, 8], strides = [1, 1]} : vector<32x96xf32> to vector<16x8xf32>
    %cst_39 = arith.constant dense<0.000000e+00> : vector<16x16xf32>
    %112 = tpu.matmul %109, %110, %cst_39 {dimension_numbers = #tpu.dot_dimension_numbers<[1], [1], [0], [0], [0, 0, 1, 0], [], []>} : vector<16x8xf32>, vector<16x8xf32>, vector<16x16xf32> -> vector<16x16xf32>
    %cst_40 = arith.constant 0.353553385 : f32
    %113 = vector.broadcast %cst_40 : f32 to vector<16x16xf32>
    %114 = arith.mulf %112, %113 : vector<16x16xf32>
    %115 = vector.broadcast %88 : vector<1x16xf32> to vector<16x16xf32>
    %116 = arith.addf %114, %115 : vector<16x16xf32>
    %cst_41 = arith.constant dense<0xFF800000> : vector<16xf32>
    %117 = vector.multi_reduction <maximumf>, %116, %cst_41 [1] : vector<16x16xf32> to vector<16xf32>
    %118 = vector.shape_cast %117 : vector<16xf32> to vector<16x1xf32>
    %119 = vector.broadcast %118 : vector<16x1xf32> to vector<16x16xf32>
    %120 = arith.subf %116, %119 : vector<16x16xf32>
    %121 = math.exp %120 : vector<16x16xf32>
    %cst_42 = arith.constant dense<0.000000e+00> : vector<16xf32>
    %122 = vector.multi_reduction <add>, %121, %cst_42 [1] : vector<16x16xf32> to vector<16xf32>
    %123 = vector.shape_cast %122 : vector<16xf32> to vector<16x1xf32>
    %124 = tpu.reciprocal %123 {approx = true} : vector<16x1xf32> -> vector<16x1xf32>
    %125 = vector.broadcast %124 : vector<16x1xf32> to vector<16x16xf32>
    %126 = arith.mulf %121, %125 : vector<16x16xf32>
    %cst_43 = arith.constant dense<0.000000e+00> : vector<16x8xf32>
    %127 = tpu.matmul %126, %111, %cst_43 {dimension_numbers = #tpu.dot_dimension_numbers<[1], [0], [0], [1], [0, 0, 1, 1], [], []>} : vector<16x16xf32>, vector<16x8xf32>, vector<16x8xf32> -> vector<16x8xf32>
    %c16_44 = arith.constant 16 : index
    %c8_45 = arith.constant 8 : index
    %128 = vector.load %arg10[%c16_44, %c8_45] : memref<32x32xf32, #tpu.memory_space<vmem>>, vector<16x8xf32>
    tpu.vector_store %arg10[%c16_44, %c8_45], %127 {strides = array<i32>} : memref<32x32xf32, #tpu.memory_space<vmem>>, vector<16x8xf32>,
    %129 = vector.extract_strided_slice %5 {offsets = [16, 16], sizes = [16, 8], strides = [1, 1]} : vector<32x96xf32> to vector<16x8xf32>
    %130 = vector.extract_strided_slice %5 {offsets = [16, 48], sizes = [16, 8], strides = [1, 1]} : vector<32x96xf32> to vector<16x8xf32>
    %131 = vector.extract_strided_slice %5 {offsets = [16, 80], sizes = [16, 8], strides = [1, 1]} : vector<32x96xf32> to vector<16x8xf32>
    %cst_46 = arith.constant dense<0.000000e+00> : vector<16x16xf32>
    %132 = tpu.matmul %129, %130, %cst_46 {dimension_numbers = #tpu.dot_dimension_numbers<[1], [1], [0], [0], [0, 0, 1, 0], [], []>} : vector<16x8xf32>, vector<16x8xf32>, vector<16x16xf32> -> vector<16x16xf32>
    %cst_47 = arith.constant 0.353553385 : f32
    %133 = vector.broadcast %cst_47 : f32 to vector<16x16xf32>
    %134 = arith.mulf %132, %133 : vector<16x16xf32>
    %135 = vector.broadcast %88 : vector<1x16xf32> to vector<16x16xf32>
    %136 = arith.addf %134, %135 : vector<16x16xf32>
    %cst_48 = arith.constant dense<0xFF800000> : vector<16xf32>
    %137 = vector.multi_reduction <maximumf>, %136, %cst_48 [1] : vector<16x16xf32> to vector<16xf32>
    %138 = vector.shape_cast %137 : vector<16xf32> to vector<16x1xf32>
    %139 = vector.broadcast %138 : vector<16x1xf32> to vector<16x16xf32>
    %140 = arith.subf %136, %139 : vector<16x16xf32>
    %141 = math.exp %140 : vector<16x16xf32>
    %cst_49 = arith.constant dense<0.000000e+00> : vector<16xf32>
    %142 = vector.multi_reduction <add>, %141, %cst_49 [1] : vector<16x16xf32> to vector<16xf32>
    %143 = vector.shape_cast %142 : vector<16xf32> to vector<16x1xf32>
    %144 = tpu.reciprocal %143 {approx = true} : vector<16x1xf32> -> vector<16x1xf32>
    %145 = vector.broadcast %144 : vector<16x1xf32> to vector<16x16xf32>
    %146 = arith.mulf %141, %145 : vector<16x16xf32>
    %cst_50 = arith.constant dense<0.000000e+00> : vector<16x8xf32>
    %147 = tpu.matmul %146, %131, %cst_50 {dimension_numbers = #tpu.dot_dimension_numbers<[1], [0], [0], [1], [0, 0, 1, 1], [], []>} : vector<16x16xf32>, vector<16x8xf32>, vector<16x8xf32> -> vector<16x8xf32>
    %c16_51 = arith.constant 16 : index
    %c16_52 = arith.constant 16 : index
    %148 = vector.load %arg10[%c16_51, %c16_52] : memref<32x32xf32, #tpu.memory_space<vmem>>, vector<16x8xf32>
    tpu.vector_store %arg10[%c16_51, %c16_52], %147 {strides = array<i32>} : memref<32x32xf32, #tpu.memory_space<vmem>>, vector<16x8xf32>,
    %149 = vector.extract_strided_slice %5 {offsets = [16, 24], sizes = [16, 8], strides = [1, 1]} : vector<32x96xf32> to vector<16x8xf32>
    %150 = vector.extract_strided_slice %5 {offsets = [16, 56], sizes = [16, 8], strides = [1, 1]} : vector<32x96xf32> to vector<16x8xf32>
    %151 = vector.extract_strided_slice %5 {offsets = [16, 88], sizes = [16, 8], strides = [1, 1]} : vector<32x96xf32> to vector<16x8xf32>
    %cst_53 = arith.constant dense<0.000000e+00> : vector<16x16xf32>
    %152 = tpu.matmul %149, %150, %cst_53 {dimension_numbers = #tpu.dot_dimension_numbers<[1], [1], [0], [0], [0, 0, 1, 0], [], []>} : vector<16x8xf32>, vector<16x8xf32>, vector<16x16xf32> -> vector<16x16xf32>
    %cst_54 = arith.constant 0.353553385 : f32
    %153 = vector.broadcast %cst_54 : f32 to vector<16x16xf32>
    %154 = arith.mulf %152, %153 : vector<16x16xf32>
    %155 = vector.broadcast %88 : vector<1x16xf32> to vector<16x16xf32>
    %156 = arith.addf %154, %155 : vector<16x16xf32>
    %cst_55 = arith.constant dense<0xFF800000> : vector<16xf32>
    %157 = vector.multi_reduction <maximumf>, %156, %cst_55 [1] : vector<16x16xf32> to vector<16xf32>
    %158 = vector.shape_cast %157 : vector<16xf32> to vector<16x1xf32>
    %159 = vector.broadcast %158 : vector<16x1xf32> to vector<16x16xf32>
    %160 = arith.subf %156, %159 : vector<16x16xf32>
    %161 = math.exp %160 : vector<16x16xf32>
    %cst_56 = arith.constant dense<0.000000e+00> : vector<16xf32>
    %162 = vector.multi_reduction <add>, %161, %cst_56 [1] : vector<16x16xf32> to vector<16xf32>
    %163 = vector.shape_cast %162 : vector<16xf32> to vector<16x1xf32>
    %164 = tpu.reciprocal %163 {approx = true} : vector<16x1xf32> -> vector<16x1xf32>
    %165 = vector.broadcast %164 : vector<16x1xf32> to vector<16x16xf32>
    %166 = arith.mulf %161, %165 : vector<16x16xf32>
    %cst_57 = arith.constant dense<0.000000e+00> : vector<16x8xf32>
    %167 = tpu.matmul %166, %151, %cst_57 {dimension_numbers = #tpu.dot_dimension_numbers<[1], [0], [0], [1], [0, 0, 1, 1], [], []>} : vector<16x16xf32>, vector<16x8xf32>, vector<16x8xf32> -> vector<16x8xf32>
    %c16_58 = arith.constant 16 : index
    %c24_59 = arith.constant 24 : index
    %168 = vector.load %arg10[%c16_58, %c24_59] : memref<32x32xf32, #tpu.memory_space<vmem>>, vector<16x8xf32>
    tpu.vector_store %arg10[%c16_58, %c24_59], %167 {strides = array<i32>} : memref<32x32xf32, #tpu.memory_space<vmem>>, vector<16x8xf32>,
    %c0_60 = arith.constant 0 : index
    %c0_61 = arith.constant 0 : index
    %169 = vector.load %arg10[%c0_60, %c0_61] : memref<32x32xf32, #tpu.memory_space<vmem>>, vector<32x32xf32>
    %c0_62 = arith.constant 0 : index
    %c0_63 = arith.constant 0 : index
    %170 = vector.load %arg4[%c0_62, %c0_63] : memref<32x32xf32, #tpu.memory_space<vmem>>, vector<32x32xf32>
    %cst_64 = arith.constant dense<0.000000e+00> : vector<32x32xf32>
    %171 = tpu.matmul %169, %170, %cst_64 {dimension_numbers = #tpu.dot_dimension_numbers<[1], [0], [0], [1], [0, 0, 1, 1], [], []>} : vector<32x32xf32>, vector<32x32xf32>, vector<32x32xf32> -> vector<32x32xf32>
    %c0_65 = arith.constant 0 : index
    %c0_66 = arith.constant 0 : index
    %172 = vector.load %arg5[%c0_65, %c0_66] : memref<1x32xf32, #tpu.memory_space<vmem>>, vector<1x32xf32>
    %173 = vector.broadcast %172 : vector<1x32xf32> to vector<32x32xf32>
    %174 = arith.addf %171, %173 : vector<32x32xf32>
    %175 = arith.addf %174, %0 : vector<32x32xf32>
    %cst_67 = arith.constant dense<0.000000e+00> : vector<32xf32>
    %176 = vector.multi_reduction <add>, %175, %cst_67 [1] : vector<32x32xf32> to vector<32xf32>
    %177 = vector.shape_cast %176 : vector<32xf32> to vector<32x1xf32>
    %cst_68 = arith.constant 3.200000e+01 : f32
    %178 = vector.broadcast %cst_68 : f32 to vector<32x1xf32>
    %179 = arith.divf %177, %178 : vector<32x1xf32>
    %180 = vector.broadcast %179 : vector<32x1xf32> to vector<32x32xf32>
    %181 = arith.subf %175, %180 : vector<32x32xf32>
    %182 = arith.mulf %181, %181 : vector<32x32xf32>
    %cst_69 = arith.constant dense<0.000000e+00> : vector<32xf32>
    %183 = vector.multi_reduction <add>, %182, %cst_69 [1] : vector<32x32xf32> to vector<32xf32>
    %184 = vector.shape_cast %183 : vector<32xf32> to vector<32x1xf32>
    %cst_70 = arith.constant 3.200000e+01 : f32
    %185 = vector.broadcast %cst_70 : f32 to vector<32x1xf32>
    %186 = arith.divf %184, %185 : vector<32x1xf32>
    %187 = vector.broadcast %179 : vector<32x1xf32> to vector<32x32xf32>
    %188 = arith.subf %175, %187 : vector<32x32xf32>
    %cst_71 = arith.constant 9.99999996E-13 : f32
    %189 = vector.broadcast %cst_71 : f32 to vector<32x1xf32>
    %190 = arith.addf %186, %189 : vector<32x1xf32>
    %191 = math.rsqrt %190 : vector<32x1xf32>
    %192 = vector.broadcast %191 : vector<32x1xf32> to vector<32x32xf32>
    %193 = arith.mulf %188, %192 : vector<32x32xf32>
    %c0_72 = arith.constant 0 : index
    %c0_73 = arith.constant 0 : index
    %194 = vector.load %arg6[%c0_72, %c0_73] : memref<1x32xf32, #tpu.memory_space<vmem>>, vector<1x32xf32>
    %195 = vector.broadcast %194 : vector<1x32xf32> to vector<32x32xf32>
    %196 = arith.mulf %193, %195 : vector<32x32xf32>
    %c0_74 = arith.constant 0 : index
    %c0_75 = arith.constant 0 : index
    %197 = vector.load %arg7[%c0_74, %c0_75] : memref<1x32xf32, #tpu.memory_space<vmem>>, vector<1x32xf32>
    %198 = vector.broadcast %197 : vector<1x32xf32> to vector<32x32xf32>
    %199 = arith.addf %196, %198 : vector<32x32xf32>
    %c0_76 = arith.constant 0 : index
    %c0_77 = arith.constant 0 : index
    %200 = vector.load %arg9[%c0_76, %c0_77] : memref<32x32xf32, #tpu.memory_space<vmem>>, vector<32x32xf32>
    tpu.vector_store %arg9[%c0_76, %c0_77], %199 {strides = array<i32>} : memref<32x32xf32, #tpu.memory_space<vmem>>, vector<32x32xf32>,
    return
  }
  func.func @transform_0(%arg0: i32) -> (i32, i32) {
    %c0_i32 = arith.constant 0 : i32
    %c0_i32_0 = arith.constant 0 : i32
    %c0_i32_1 = arith.constant 0 : i32
    return %c0_i32, %c0_i32_0 : i32, i32
  }
  func.func @transform_1(%arg0: i32) -> (i32, i32) {
    %c0_i32 = arith.constant 0 : i32
    %c0_i32_0 = arith.constant 0 : i32
    %c0_i32_1 = arith.constant 0 : i32
    return %c0_i32, %c0_i32_0 : i32, i32
  }
  func.func @transform_2(%arg0: i32) -> (i32, i32) {
    %c0_i32 = arith.constant 0 : i32
    %c0_i32_0 = arith.constant 0 : i32
    %c0_i32_1 = arith.constant 0 : i32
    return %c0_i32, %c0_i32_0 : i32, i32
  }
  func.func @transform_3(%arg0: i32) -> (i32, i32) {
    %c0_i32 = arith.constant 0 : i32
    %c0_i32_0 = arith.constant 0 : i32
    %c0_i32_1 = arith.constant 0 : i32
    return %c0_i32, %c0_i32_0 : i32, i32
  }
  func.func @transform_4(%arg0: i32) -> (i32, i32) {
    %c0_i32 = arith.constant 0 : i32
    %c0_i32_0 = arith.constant 0 : i32
    %c0_i32_1 = arith.constant 0 : i32
    return %c0_i32, %c0_i32_0 : i32, i32
  }
  func.func @transform_5(%arg0: i32) -> (i32, i32) {
    %c0_i32 = arith.constant 0 : i32
    %c0_i32_0 = arith.constant 0 : i32
    %c0_i32_1 = arith.constant 0 : i32
    return %c0_i32, %c0_i32_0 : i32, i32
  }
  func.func @transform_6(%arg0: i32) -> (i32, i32) {
    %c0_i32 = arith.constant 0 : i32
    %c0_i32_0 = arith.constant 0 : i32
    %c0_i32_1 = arith.constant 0 : i32
    return %c0_i32, %c0_i32_0 : i32, i32
  }
  func.func @transform_7(%arg0: i32) -> (i32, i32) {
    %c0_i32 = arith.constant 0 : i32
    %c0_i32_0 = arith.constant 0 : i32
    %c0_i32_1 = arith.constant 0 : i32
    return %c0_i32, %c0_i32_0 : i32, i32
  }
  func.func @transform_8(%arg0: i32) -> (i32, i32) {
    %c0_i32 = arith.constant 0 : i32
    %c0_i32_0 = arith.constant 0 : i32
    %c0_i32_1 = arith.constant 0 : i32
    return %c0_i32, %c0_i32_0 : i32, i32
  }
}

</mosaic_0001>

<llo_original>
// kernel: bert_attention_forward.1
$region0: #{bert_attention_forward.1}
  #allocation0 [shape = 'u32[]', space=smem, size = 0x4, offset = 0x4, fixed_abs, tag = 'smem constant byte address 0x4 - core index']
  #allocation1 [shape = 'u32[72,128]{1,0:T(1,128)}', space=vmem, size = 0x9000, scoped, tag = 'internal scratch']
  #allocation2 [shape = 'f32[32,32]{1,0:T(8,128)}', space=vmem, size = 0x4000, scoped, tag = 'scratch operand']
  %s0 = inlined_call_operand.vmem [shape: f32[32,32], index: 0, kind: input, shape index: {}]
  %s1 = inlined_call_operand.vmem [shape: f32[32,96], index: 1, kind: input, shape index: {}]
  %s2 = inlined_call_operand.vmem [shape: f32[1,96], index: 2, kind: input, shape index: {}]
  %s3 = inlined_call_operand.vmem [shape: f32[32,32], index: 3, kind: input, shape index: {}]
  %s4 = inlined_call_operand.vmem [shape: f32[1,32], index: 4, kind: input, shape index: {}]
  %s5 = inlined_call_operand.vmem [shape: f32[1,32], index: 5, kind: input, shape index: {}]
  %s6 = inlined_call_operand.vmem [shape: f32[1,32], index: 6, kind: input, shape index: {}]
  %s7 = inlined_call_operand.vmem [shape: f32[2,16], index: 7, kind: input, shape index: {}]
  %s8 = inlined_call_operand.hbm [shape: f32[32,32], index: 8, kind: output, shape index: {}]
  %s9 = sld [smem:[#allocation0]]
  $region42: #{bert_attention_forward.1} parent=0
    _
  %s11 = ssub.s32 1, %s9
  %s12 = scalar_select 0, %s11, %s9
  $region1: #{bert_attention_forward.1} parent=0
    #allocation3 [shape = 'u8[16384]{0}', space=vmem, size = 0x4000, scoped, tag = 'output window, operand 0, single buffered']
    #allocation4 [shape = 's32[1]{0}', space=sflag, size = 0x4, scoped, tag = 'scoped memory for bert_attention_forward.1']
    %13 = vsyncpa [#allocation4], 0
    // Predicated region
    $region2: #{bert_attention_forward.1} parent=1 // pred_check
      _
    $region3: #{bert_attention_forward.1} parent=1 // pred_check_branch
      %15 = sbr.rel (0) target = $region5
    $region4: #{bert_attention_forward.1} parent=1 // pred_region
      _
    $region5: #{bert_attention_forward.1} parent=1 // pred_fallthru
      _
    // Predicated region
    $region6: #{bert_attention_forward.1} parent=1 // pred_check
      _
    $region7: #{bert_attention_forward.1} parent=1 // pred_check_branch
      %17 = sbr.rel (0) target = $region9
    $region8: #{bert_attention_forward.1} parent=1 // pred_region
      _
    $region9: #{bert_attention_forward.1} parent=1 // pred_fallthru
      _
    // Predicated region
    $region10: #{bert_attention_forward.1} parent=1 // pred_check
      _
    $region11: #{bert_attention_forward.1} parent=1 // pred_check_branch
      %19 = sbr.rel (0) target = $region13
    $region12: #{bert_attention_forward.1} parent=1 // pred_region
      _
    $region13: #{bert_attention_forward.1} parent=1 // pred_fallthru
      _
    // Predicated region
    $region14: #{bert_attention_forward.1} parent=1 // pred_check
      _
    $region15: #{bert_attention_forward.1} parent=1 // pred_check_branch
      %21 = sbr.rel (0) target = $region17
    $region16: #{bert_attention_forward.1} parent=1 // pred_region
      _
    $region17: #{bert_attention_forward.1} parent=1 // pred_fallthru
      _
    // Predicated region
    $region18: #{bert_attention_forward.1} parent=1 // pred_check
      _
    $region19: #{bert_attention_forward.1} parent=1 // pred_check_branch
      %23 = sbr.rel (0) target = $region21
    $region20: #{bert_attention_forward.1} parent=1 // pred_region
      _
    $region21: #{bert_attention_forward.1} parent=1 // pred_fallthru
      _
    // Predicated region
    $region22: #{bert_attention_forward.1} parent=1 // pred_check
      _
    $region23: #{bert_attention_forward.1} parent=1 // pred_check_branch
      %25 = sbr.rel (0) target = $region25
    $region24: #{bert_attention_forward.1} parent=1 // pred_region
      _
    $region25: #{bert_attention_forward.1} parent=1 // pred_fallthru
      _
    // Predicated region
    $region26: #{bert_attention_forward.1} parent=1 // pred_check
      _
    $region27: #{bert_attention_forward.1} parent=1 // pred_check_branch
      %27 = sbr.rel (0) target = $region29
    $region28: #{bert_attention_forward.1} parent=1 // pred_region
      _
    $region29: #{bert_attention_forward.1} parent=1 // pred_fallthru
      _
    // Predicated region
    $region30: #{bert_attention_forward.1} parent=1 // pred_check
      _
    $region31: #{bert_attention_forward.1} parent=1 // pred_check_branch
      %29 = sbr.rel (0) target = $region33
    $region32: #{bert_attention_forward.1} parent=1 // pred_region
      _
    $region33: #{bert_attention_forward.1} parent=1 // pred_fallthru
      _
    %v30 = vld [vmem:[%s0] sm:$0xff]
    %v31 = vld [vmem:[%s0 + $0x8] sm:$0xff]
    %v32 = vld [vmem:[%s0 + $0x10] sm:$0xff]
    %v33 = vld [vmem:[%s0 + $0x18] sm:$0xff]
    %v34 = vld [vmem:[%s1] sm:$0xff]
    %v35 = vld [vmem:[%s1 + $0x8] sm:$0xff]
    %v36 = vld [vmem:[%s1 + $0x10] sm:$0xff]
    %v37 = vld [vmem:[%s1 + $0x18] sm:$0xff]
    %v38 = vld [vmem:[%s2] sm:$0x1]
    %v40 = vperm.slane %v38, 0
    %vm42 = vcmask 261120
    %v44 = vsel %vm42, %v30, 0
    %v47 = vsel %vm42, %v31, 0
    %v50 = vsel %vm42, %v32, 0
    %v53 = vsel %vm42, %v33, 0
    %55 = vmatpush.msra.mxu0 0.0
    %56 = vmatpush.msra.mxu0 0.0
    %57 = vmatpush.msra.mxu0 0.0
    %58 = vmatpush.msra.mxu0 0.0
    %59 = vmatpush.msra.mxu0 0.0
    %60 = vmatpush.msra.mxu0 0.0
    %61 = vmatpush.msra.mxu0 0.0
    %62 = vmatpush.msra.mxu0 0.0
    %63 = vmatpush.msra.mxu0 0.0
    %64 = vmatpush.msra.mxu0 0.0
    %65 = vmatpush.msra.mxu0 0.0
    %66 = vmatpush.msra.mxu0 0.0
    %67 = vmatpush.msra.mxu0 %v37
    %68 = vmatpush.msra.mxu0 %v36
    %69 = vmatpush.msra.mxu0 %v35
    %70 = vmatpush.msra.mxu0 %v34
    %71 = vmatmul.f32.gmra.mxu0 %v44
    %v72 = vpop.f32.mrf.mxu0
    %v73 = vadd.f32 %v40, %v72
    %74 = vmatmul.f32.gmra.mxu0 %v47
    %v75 = vpop.f32.mrf.mxu0
    %v76 = vadd.f32 %v40, %v75
    %77 = vmatmul.f32.gmra.mxu0 %v50
    %v78 = vpop.f32.mrf.mxu0
    %v79 = vadd.f32 %v40, %v78
    %80 = vmatmul.f32.gmra.mxu0 %v53
    %v81 = vpop.f32.mrf.mxu0
    %v82 = vadd.f32 %v40, %v81
    %83 = vdwg.mxu0
    %v84 = vld [vmem:[%s7] sm:$0x3]
    %87 = vrot.lane.b32.xlu0 %v73, 96
    %v88 = vpop.permute.xlu0 %87
    %89 = vrot.lane.b32.xlu0 %v76, 96
    %v90 = vpop.permute.xlu0 %89
    %vm91 = vcmask 64512
    %v92 = vsel %vm91, %v73, 0
    %v94 = vsel %vm91, %v76, 0
    %v96 = vsel %vm91, %v88, 0
    %v98 = vsel %vm91, %v90, 0
    %100 = vmatpush.xpose.msra.mxu0 0.0
    %101 = vmatpush.xpose.msra.mxu0 0.0
    %102 = vmatpush.xpose.msra.mxu0 0.0
    %103 = vmatpush.xpose.msra.mxu0 0.0
    %104 = vmatpush.xpose.msra.mxu0 0.0
    %105 = vmatpush.xpose.msra.mxu0 0.0
    %106 = vmatpush.xpose.msra.mxu0 0.0
    %107 = vmatpush.xpose.msra.mxu0 0.0
    %108 = vmatpush.xpose.msra.mxu0 0.0
    %109 = vmatpush.xpose.msra.mxu0 0.0
    %110 = vmatpush.xpose.msra.mxu0 0.0
    %111 = vmatpush.xpose.msra.mxu0 0.0
    %112 = vmatpush.xpose.msra.mxu0 0.0
    %113 = vmatpush.xpose.msra.mxu0 0.0
    %114 = vmatpush.xpose.msra.mxu0 %v98
    %115 = vmatpush.xpose.msra.mxu0 %v96
    %116 = vmatmul.f32.gmra.mxu0 %v92
    %v117 = vpop.f32.mrf.mxu0
    %v118 = vadd.f32 0.0, %v117
    %119 = vmatmul.f32.gmra.mxu0 %v94
    %v120 = vpop.f32.mrf.mxu0
    %v121 = vadd.f32 0.0, %v120
    %122 = vdwg.mxu0
    %v123 = vmul.f32 %v118, 0.35355338
    %v124 = vmul.f32 %v121, 0.35355338
    %v125 = vperm.slane %v84, 0
    %v126 = vadd.f32 %v123, %v125
    %v127 = vadd.f32 %v124, %v125
    %vm128 = vcmask 130048
    %v129 = vsel %vm128, %v126, -inf
    %130 = vmax.xlane.f32.xlu0 %v129
    %v131 = vpop.xlane.xlu0 %130
    %v132 = vsel %vm128, %v127, -inf
    %133 = vmax.xlane.f32.xlu0 %v132
    %v134 = vpop.xlane.xlu0 %133
    %v135 = vsub.f32 %v126, %v131
    %v136 = vsub.f32 %v127, %v134
    %v137 = vmul.f32 %v135, 1.442695
    %v138 = vpow.pop %v137
    %v139 = vmul.f32 %v136, 1.442695
    %v140 = vpow.pop %v139
    %v141 = vsel %vm128, %v138, 0.0
    %142 = vadd.xlane.f32.xlu0 %v141
    %v143 = vpop.xlane.xlu0 %142
    %v144 = vsel %vm128, %v140, 0.0
    %145 = vadd.xlane.f32.xlu0 %v144
    %v146 = vpop.xlane.xlu0 %145
    %v147 = vrcp.pop %v143
    %v148 = vrcp.pop %v146
    %v149 = vmul.f32 %v138, %v147
    %v150 = vmul.f32 %v140, %v148
    %151 = vrot.lane.b32.xlu0 %v73, 64
    %v152 = vpop.permute.xlu0 %151
    %153 = vrot.lane.b32.xlu0 %v76, 64
    %v154 = vpop.permute.xlu0 %153
    %v158 = vsel %vm128, %v149, 0
    %v161 = vsel %vm128, %v150, 0
    %163 = vmatpush.msra.mxu0 0.0
    %164 = vmatpush.msra.mxu0 0.0
    %165 = vmatpush.msra.mxu0 0.0
    %166 = vmatpush.msra.mxu0 0.0
    %167 = vmatpush.msra.mxu0 0.0
    %168 = vmatpush.msra.mxu0 0.0
    %169 = vmatpush.msra.mxu0 0.0
    %170 = vmatpush.msra.mxu0 0.0
    %171 = vmatpush.msra.mxu0 0.0
    %172 = vmatpush.msra.mxu0 0.0
    %173 = vmatpush.msra.mxu0 0.0
    %174 = vmatpush.msra.mxu0 0.0
    %175 = vmatpush.msra.mxu0 0.0
    %176 = vmatpush.msra.mxu0 0.0
    %177 = vmatpush.msra.mxu0 %v154
    %178 = vmatpush.msra.mxu0 %v152
    %179 = vmatmul.f32.gmra.mxu0 %v158
    %v180 = vpop.f32.mrf.mxu0
    %v181 = vadd.f32 0.0, %v180
    %182 = vmatmul.f32.gmra.mxu0 %v161
    %v183 = vpop.f32.mrf.mxu0
    %v184 = vadd.f32 0.0, %v183
    %185 = vdwg.mxu0
    %186 = vst.msk [vmem:[#allocation2] sm:$0xff] %vm91, %v181
    %187 = vst.msk [vmem:[#allocation2 + $0x8] sm:$0xff] %vm91, %v184
    %188 = vrot.lane.b32.xlu0 %v73, 120
    %v189 = vpop.permute.xlu0 %188
    %190 = vrot.lane.b32.xlu0 %v76, 120
    %v191 = vpop.permute.xlu0 %190
    %192 = vrot.lane.b32.xlu0 %v73, 88
    %v193 = vpop.permute.xlu0 %192
    %194 = vrot.lane.b32.xlu0 %v76, 88
    %v195 = vpop.permute.xlu0 %194
    %v196 = vsel %vm91, %v189, 0
    %v198 = vsel %vm91, %v191, 0
    %v200 = vsel %vm91, %v193, 0
    %v202 = vsel %vm91, %v195, 0
    %204 = vmatpush.xpose.msra.mxu0 0.0
    %205 = vmatpush.xpose.msra.mxu0 0.0
    %206 = vmatpush.xpose.msra.mxu0 0.0
    %207 = vmatpush.xpose.msra.mxu0 0.0
    %208 = vmatpush.xpose.msra.mxu0 0.0
    %209 = vmatpush.xpose.msra.mxu0 0.0
    %210 = vmatpush.xpose.msra.mxu0 0.0
    %211 = vmatpush.xpose.msra.mxu0 0.0
    %212 = vmatpush.xpose.msra.mxu0 0.0
    %213 = vmatpush.xpose.msra.mxu0 0.0
    %214 = vmatpush.xpose.msra.mxu0 0.0
    %215 = vmatpush.xpose.msra.mxu0 0.0
    %216 = vmatpush.xpose.msra.mxu0 0.0
    %217 = vmatpush.xpose.msra.mxu0 0.0
    %218 = vmatpush.xpose.msra.mxu0 %v202
    %219 = vmatpush.xpose.msra.mxu0 %v200
    %220 = vmatmul.f32.gmra.mxu0 %v196
    %v221 = vpop.f32.mrf.mxu0
    %v222 = vadd.f32 0.0, %v221
    %223 = vmatmul.f32.gmra.mxu0 %v198
    %v224 = vpop.f32.mrf.mxu0
    %v225 = vadd.f32 0.0, %v224
    %226 = vdwg.mxu0
    %v227 = vmul.f32 %v222, 0.35355338
    %v228 = vmul.f32 %v225, 0.35355338
    %v229 = vadd.f32 %v227, %v125
    %v230 = vadd.f32 %v228, %v125
    %v231 = vsel %vm128, %v229, -inf
    %232 = vmax.xlane.f32.xlu0 %v231
    %v233 = vpop.xlane.xlu0 %232
    %v234 = vsel %vm128, %v230, -inf
    %235 = vmax.xlane.f32.xlu0 %v234
    %v236 = vpop.xlane.xlu0 %235
    %v237 = vsub.f32 %v229, %v233
    %v238 = vsub.f32 %v230, %v236
    %v239 = vmul.f32 %v237, 1.442695
    %v240 = vpow.pop %v239
    %v241 = vmul.f32 %v238, 1.442695
    %v242 = vpow.pop %v241
    %v243 = vsel %vm128, %v240, 0.0
    %244 = vadd.xlane.f32.xlu0 %v243
    %v245 = vpop.xlane.xlu0 %244
    %v246 = vsel %vm128, %v242, 0.0
    %247 = vadd.xlane.f32.xlu0 %v246
    %v248 = vpop.xlane.xlu0 %247
    %v249 = vrcp.pop %v245
    %v250 = vrcp.pop %v248
    %v251 = vmul.f32 %v240, %v249
    %v252 = vmul.f32 %v242, %v250
    %253 = vrot.lane.b32.xlu0 %v73, 56
    %v254 = vpop.permute.xlu0 %253
    %255 = vrot.lane.b32.xlu0 %v76, 56
    %v256 = vpop.permute.xlu0 %255
    %v260 = vsel %vm128, %v251, 0
    %v263 = vsel %vm128, %v252, 0
    %265 = vmatpush.msra.mxu0 0.0
    %266 = vmatpush.msra.mxu0 0.0
    %267 = vmatpush.msra.mxu0 0.0
    %268 = vmatpush.msra.mxu0 0.0
    %269 = vmatpush.msra.mxu0 0.0
    %270 = vmatpush.msra.mxu0 0.0
    %271 = vmatpush.msra.mxu0 0.0
    %272 = vmatpush.msra.mxu0 0.0
    %273 = vmatpush.msra.mxu0 0.0
    %274 = vmatpush.msra.mxu0 0.0
    %275 = vmatpush.msra.mxu0 0.0
    %276 = vmatpush.msra.mxu0 0.0
    %277 = vmatpush.msra.mxu0 0.0
    %278 = vmatpush.msra.mxu0 0.0
    %279 = vmatpush.msra.mxu0 %v256
    %280 = vmatpush.msra.mxu0 %v254
    %281 = vmatmul.f32.gmra.mxu0 %v260
    %v282 = vpop.f32.mrf.mxu0
    %v283 = vadd.f32 0.0, %v282
    %284 = vmatmul.f32.gmra.mxu0 %v263
    %v285 = vpop.f32.mrf.mxu0
    %v286 = vadd.f32 0.0, %v285
    %287 = vdwg.mxu0
    %290 = vrot.lane.b32.xlu0 %v283, 8
    %v291 = vpop.permute.xlu0 %290
    %292 = vrot.lane.b32.xlu0 %v286, 8
    %v293 = vpop.permute.xlu0 %292
    %vm296 = vcmask 130112
    %297 = vst.msk [vmem:[#allocation2] sm:$0xff] %vm296, %v291
    %298 = vst.msk [vmem:[#allocation2 + $0x8] sm:$0xff] %vm296, %v293
    %299 = vrot.lane.b32.xlu0 %v73, 112
    %v300 = vpop.permute.xlu0 %299
    %301 = vrot.lane.b32.xlu0 %v76, 112
    %v302 = vpop.permute.xlu0 %301
    %303 = vrot.lane.b32.xlu0 %v73, 80
    %v304 = vpop.permute.xlu0 %303
    %305 = vrot.lane.b32.xlu0 %v76, 80
    %v306 = vpop.permute.xlu0 %305
    %v307 = vsel %vm91, %v300, 0
    %v309 = vsel %vm91, %v302, 0
    %v311 = vsel %vm91, %v304, 0
    %v313 = vsel %vm91, %v306, 0
    %315 = vmatpush.xpose.msra.mxu0 0.0
    %316 = vmatpush.xpose.msra.mxu0 0.0
    %317 = vmatpush.xpose.msra.mxu0 0.0
    %318 = vmatpush.xpose.msra.mxu0 0.0
    %319 = vmatpush.xpose.msra.mxu0 0.0
    %320 = vmatpush.xpose.msra.mxu0 0.0
    %321 = vmatpush.xpose.msra.mxu0 0.0
    %322 = vmatpush.xpose.msra.mxu0 0.0
    %323 = vmatpush.xpose.msra.mxu0 0.0
    %324 = vmatpush.xpose.msra.mxu0 0.0
    %325 = vmatpush.xpose.msra.mxu0 0.0
    %326 = vmatpush.xpose.msra.mxu0 0.0
    %327 = vmatpush.xpose.msra.mxu0 0.0
    %328 = vmatpush.xpose.msra.mxu0 0.0
    %329 = vmatpush.xpose.msra.mxu0 %v313
    %330 = vmatpush.xpose.msra.mxu0 %v311
    %331 = vmatmul.f32.gmra.mxu0 %v307
    %v332 = vpop.f32.mrf.mxu0
    %v333 = vadd.f32 0.0, %v332
    %334 = vmatmul.f32.gmra.mxu0 %v309
    %v335 = vpop.f32.mrf.mxu0
    %v336 = vadd.f32 0.0, %v335
    %337 = vdwg.mxu0
    %v338 = vmul.f32 %v333, 0.35355338
    %v339 = vmul.f32 %v336, 0.35355338
    %v340 = vadd.f32 %v338, %v125
    %v341 = vadd.f32 %v339, %v125
    %v342 = vsel %vm128, %v340, -inf
    %343 = vmax.xlane.f32.xlu0 %v342
    %v344 = vpop.xlane.xlu0 %343
    %v345 = vsel %vm128, %v341, -inf
    %346 = vmax.xlane.f32.xlu0 %v345
    %v347 = vpop.xlane.xlu0 %346
    %v348 = vsub.f32 %v340, %v344
    %v349 = vsub.f32 %v341, %v347
    %v350 = vmul.f32 %v348, 1.442695
    %v351 = vpow.pop %v350
    %v352 = vmul.f32 %v349, 1.442695
    %v353 = vpow.pop %v352
    %v354 = vsel %vm128, %v351, 0.0
    %355 = vadd.xlane.f32.xlu0 %v354
    %v356 = vpop.xlane.xlu0 %355
    %v357 = vsel %vm128, %v353, 0.0
    %358 = vadd.xlane.f32.xlu0 %v357
    %v359 = vpop.xlane.xlu0 %358
    %v360 = vrcp.pop %v356
    %v361 = vrcp.pop %v359
    %v362 = vmul.f32 %v351, %v360
    %v363 = vmul.f32 %v353, %v361
    %364 = vrot.lane.b32.xlu0 %v73, 48
    %v365 = vpop.permute.xlu0 %364
    %366 = vrot.lane.b32.xlu0 %v76, 48
    %v367 = vpop.permute.xlu0 %366
    %v371 = vsel %vm128, %v362, 0
    %v374 = vsel %vm128, %v363, 0
    %376 = vmatpush.msra.mxu0 0.0
    %377 = vmatpush.msra.mxu0 0.0
    %378 = vmatpush.msra.mxu0 0.0
    %379 = vmatpush.msra.mxu0 0.0
    %380 = vmatpush.msra.mxu0 0.0
    %381 = vmatpush.msra.mxu0 0.0
    %382 = vmatpush.msra.mxu0 0.0
    %383 = vmatpush.msra.mxu0 0.0
    %384 = vmatpush.msra.mxu0 0.0
    %385 = vmatpush.msra.mxu0 0.0
    %386 = vmatpush.msra.mxu0 0.0
    %387 = vmatpush.msra.mxu0 0.0
    %388 = vmatpush.msra.mxu0 0.0
    %389 = vmatpush.msra.mxu0 0.0
    %390 = vmatpush.msra.mxu0 %v367
    %391 = vmatpush.msra.mxu0 %v365
    %392 = vmatmul.f32.gmra.mxu0 %v371
    %v393 = vpop.f32.mrf.mxu0
    %v394 = vadd.f32 0.0, %v393
    %395 = vmatmul.f32.gmra.mxu0 %v374
    %v396 = vpop.f32.mrf.mxu0
    %v397 = vadd.f32 0.0, %v396
    %398 = vdwg.mxu0
    %401 = vrot.lane.b32.xlu0 %v394, 16
    %v402 = vpop.permute.xlu0 %401
    %403 = vrot.lane.b32.xlu0 %v397, 16
    %v404 = vpop.permute.xlu0 %403
    %vm407 = vcmask 195712
    %408 = vst.msk [vmem:[#allocation2] sm:$0xff] %vm407, %v402
    %409 = vst.msk [vmem:[#allocation2 + $0x8] sm:$0xff] %vm407, %v404
    %410 = vrot.lane.b32.xlu0 %v73, 104
    %v411 = vpop.permute.xlu0 %410
    %412 = vrot.lane.b32.xlu0 %v76, 104
    %v413 = vpop.permute.xlu0 %412
    %414 = vrot.lane.b32.xlu0 %v73, 72
    %v415 = vpop.permute.xlu0 %414
    %416 = vrot.lane.b32.xlu0 %v76, 72
    %v417 = vpop.permute.xlu0 %416
    %v418 = vsel %vm91, %v411, 0
    %v420 = vsel %vm91, %v413, 0
    %v422 = vsel %vm91, %v415, 0
    %v424 = vsel %vm91, %v417, 0
    %426 = vmatpush.xpose.msra.mxu0 0.0
    %427 = vmatpush.xpose.msra.mxu0 0.0
    %428 = vmatpush.xpose.msra.mxu0 0.0
    %429 = vmatpush.xpose.msra.mxu0 0.0
    %430 = vmatpush.xpose.msra.mxu0 0.0
    %431 = vmatpush.xpose.msra.mxu0 0.0
    %432 = vmatpush.xpose.msra.mxu0 0.0
    %433 = vmatpush.xpose.msra.mxu0 0.0
    %434 = vmatpush.xpose.msra.mxu0 0.0
    %435 = vmatpush.xpose.msra.mxu0 0.0
    %436 = vmatpush.xpose.msra.mxu0 0.0
    %437 = vmatpush.xpose.msra.mxu0 0.0
    %438 = vmatpush.xpose.msra.mxu0 0.0
    %439 = vmatpush.xpose.msra.mxu0 0.0
    %440 = vmatpush.xpose.msra.mxu0 %v424
    %441 = vmatpush.xpose.msra.mxu0 %v422
    %442 = vmatmul.f32.gmra.mxu0 %v418
    %v443 = vpop.f32.mrf.mxu0
    %v444 = vadd.f32 0.0, %v443
    %445 = vmatmul.f32.gmra.mxu0 %v420
    %v446 = vpop.f32.mrf.mxu0
    %v447 = vadd.f32 0.0, %v446
    %448 = vdwg.mxu0
    %v449 = vmul.f32 %v444, 0.35355338
    %v450 = vmul.f32 %v447, 0.35355338
    %v451 = vadd.f32 %v449, %v125
    %v452 = vadd.f32 %v450, %v125
    %v453 = vsel %vm128, %v451, -inf
    %454 = vmax.xlane.f32.xlu0 %v453
    %v455 = vpop.xlane.xlu0 %454
    %v456 = vsel %vm128, %v452, -inf
    %457 = vmax.xlane.f32.xlu0 %v456
    %v458 = vpop.xlane.xlu0 %457
    %v459 = vsub.f32 %v451, %v455
    %v460 = vsub.f32 %v452, %v458
    %v461 = vmul.f32 %v459, 1.442695
    %v462 = vpow.pop %v461
    %v463 = vmul.f32 %v460, 1.442695
    %v464 = vpow.pop %v463
    %v465 = vsel %vm128, %v462, 0.0
    %466 = vadd.xlane.f32.xlu0 %v465
    %v467 = vpop.xlane.xlu0 %466
    %v468 = vsel %vm128, %v464, 0.0
    %469 = vadd.xlane.f32.xlu0 %v468
    %v470 = vpop.xlane.xlu0 %469
    %v471 = vrcp.pop %v467
    %v472 = vrcp.pop %v470
    %v473 = vmul.f32 %v462, %v471
    %v474 = vmul.f32 %v464, %v472
    %475 = vrot.lane.b32.xlu0 %v73, 40
    %v476 = vpop.permute.xlu0 %475
    %477 = vrot.lane.b32.xlu0 %v76, 40
    %v478 = vpop.permute.xlu0 %477
    %v482 = vsel %vm128, %v473, 0
    %v485 = vsel %vm128, %v474, 0
    %487 = vmatpush.msra.mxu0 0.0
    %488 = vmatpush.msra.mxu0 0.0
    %489 = vmatpush.msra.mxu0 0.0
    %490 = vmatpush.msra.mxu0 0.0
    %491 = vmatpush.msra.mxu0 0.0
    %492 = vmatpush.msra.mxu0 0.0
    %493 = vmatpush.msra.mxu0 0.0
    %494 = vmatpush.msra.mxu0 0.0
    %495 = vmatpush.msra.mxu0 0.0
    %496 = vmatpush.msra.mxu0 0.0
    %497 = vmatpush.msra.mxu0 0.0
    %498 = vmatpush.msra.mxu0 0.0
    %499 = vmatpush.msra.mxu0 0.0
    %500 = vmatpush.msra.mxu0 0.0
    %501 = vmatpush.msra.mxu0 %v478
    %502 = vmatpush.msra.mxu0 %v476
    %503 = vmatmul.f32.gmra.mxu0 %v482
    %v504 = vpop.f32.mrf.mxu0
    %v505 = vadd.f32 0.0, %v504
    %506 = vmatmul.f32.gmra.mxu0 %v485
    %v507 = vpop.f32.mrf.mxu0
    %v508 = vadd.f32 0.0, %v507
    %509 = vdwg.mxu0
    %512 = vrot.lane.b32.xlu0 %v505, 24
    %v513 = vpop.permute.xlu0 %512
    %514 = vrot.lane.b32.xlu0 %v508, 24
    %v515 = vpop.permute.xlu0 %514
    %vm518 = vcmask 261312
    %519 = vst.msk [vmem:[#allocation2] sm:$0xff] %vm518, %v513
    %520 = vst.msk [vmem:[#allocation2 + $0x8] sm:$0xff] %vm518, %v515
    %523 = vrot.lane.b32.xlu0 %v79, 96
    %v524 = vpop.permute.xlu0 %523
    %525 = vrot.lane.b32.xlu0 %v82, 96
    %v526 = vpop.permute.xlu0 %525
    %v527 = vsel %vm91, %v79, 0
    %v529 = vsel %vm91, %v82, 0
    %v531 = vsel %vm91, %v524, 0
    %v533 = vsel %vm91, %v526, 0
    %535 = vmatpush.xpose.msra.mxu0 0.0
    %536 = vmatpush.xpose.msra.mxu0 0.0
    %537 = vmatpush.xpose.msra.mxu0 0.0
    %538 = vmatpush.xpose.msra.mxu0 0.0
    %539 = vmatpush.xpose.msra.mxu0 0.0
    %540 = vmatpush.xpose.msra.mxu0 0.0
    %541 = vmatpush.xpose.msra.mxu0 0.0
    %542 = vmatpush.xpose.msra.mxu0 0.0
    %543 = vmatpush.xpose.msra.mxu0 0.0
    %544 = vmatpush.xpose.msra.mxu0 0.0
    %545 = vmatpush.xpose.msra.mxu0 0.0
    %546 = vmatpush.xpose.msra.mxu0 0.0
    %547 = vmatpush.xpose.msra.mxu0 0.0
    %548 = vmatpush.xpose.msra.mxu0 0.0
    %549 = vmatpush.xpose.msra.mxu0 %v533
    %550 = vmatpush.xpose.msra.mxu0 %v531
    %551 = vmatmul.f32.gmra.mxu0 %v527
    %v552 = vpop.f32.mrf.mxu0
    %v553 = vadd.f32 0.0, %v552
    %554 = vmatmul.f32.gmra.mxu0 %v529
    %v555 = vpop.f32.mrf.mxu0
    %v556 = vadd.f32 0.0, %v555
    %557 = vdwg.mxu0
    %v558 = vmul.f32 %v553, 0.35355338
    %v559 = vmul.f32 %v556, 0.35355338
    %v560 = vperm.slane %v84, 1
    %v561 = vadd.f32 %v558, %v560
    %v562 = vadd.f32 %v559, %v560
    %v563 = vsel %vm128, %v561, -inf
    %564 = vmax.xlane.f32.xlu0 %v563
    %v565 = vpop.xlane.xlu0 %564
    %v566 = vsel %vm128, %v562, -inf
    %567 = vmax.xlane.f32.xlu0 %v566
    %v568 = vpop.xlane.xlu0 %567
    %v569 = vsub.f32 %v561, %v565
    %v570 = vsub.f32 %v562, %v568
    %v571 = vmul.f32 %v569, 1.442695
    %v572 = vpow.pop %v571
    %v573 = vmul.f32 %v570, 1.442695
    %v574 = vpow.pop %v573
    %v575 = vsel %vm128, %v572, 0.0
    %576 = vadd.xlane.f32.xlu0 %v575
    %v577 = vpop.xlane.xlu0 %576
    %v578 = vsel %vm128, %v574, 0.0
    %579 = vadd.xlane.f32.xlu0 %v578
    %v580 = vpop.xlane.xlu0 %579
    %v581 = vrcp.pop %v577
    %v582 = vrcp.pop %v580
    %v583 = vmul.f32 %v572, %v581
    %v584 = vmul.f32 %v574, %v582
    %585 = vrot.lane.b32.xlu0 %v79, 64
    %v586 = vpop.permute.xlu0 %585
    %587 = vrot.lane.b32.xlu0 %v82, 64
    %v588 = vpop.permute.xlu0 %587
    %v592 = vsel %vm128, %v583, 0
    %v595 = vsel %vm128, %v584, 0
    %597 = vmatpush.msra.mxu0 0.0
    %598 = vmatpush.msra.mxu0 0.0
    %599 = vmatpush.msra.mxu0 0.0
    %600 = vmatpush.msra.mxu0 0.0
    %601 = vmatpush.msra.mxu0 0.0
    %602 = vmatpush.msra.mxu0 0.0
    %603 = vmatpush.msra.mxu0 0.0
    %604 = vmatpush.msra.mxu0 0.0
    %605 = vmatpush.msra.mxu0 0.0
    %606 = vmatpush.msra.mxu0 0.0
    %607 = vmatpush.msra.mxu0 0.0
    %608 = vmatpush.msra.mxu0 0.0
    %609 = vmatpush.msra.mxu0 0.0
    %610 = vmatpush.msra.mxu0 0.0
    %611 = vmatpush.msra.mxu0 %v588
    %612 = vmatpush.msra.mxu0 %v586
    %613 = vmatmul.f32.gmra.mxu0 %v592
    %v614 = vpop.f32.mrf.mxu0
    %v615 = vadd.f32 0.0, %v614
    %616 = vmatmul.f32.gmra.mxu0 %v595
    %v617 = vpop.f32.mrf.mxu0
    %v618 = vadd.f32 0.0, %v617
    %619 = vdwg.mxu0
    %620 = vst.msk [vmem:[#allocation2 + $0x10] sm:$0xff] %vm91, %v615
    %621 = vst.msk [vmem:[#allocation2 + $0x18] sm:$0xff] %vm91, %v618
    %622 = vrot.lane.b32.xlu0 %v79, 120
    %v623 = vpop.permute.xlu0 %622
    %624 = vrot.lane.b32.xlu0 %v82, 120
    %v625 = vpop.permute.xlu0 %624
    %626 = vrot.lane.b32.xlu0 %v79, 88
    %v627 = vpop.permute.xlu0 %626
    %628 = vrot.lane.b32.xlu0 %v82, 88
    %v629 = vpop.permute.xlu0 %628
    %v630 = vsel %vm91, %v623, 0
    %v632 = vsel %vm91, %v625, 0
    %v634 = vsel %vm91, %v627, 0
    %v636 = vsel %vm91, %v629, 0
    %638 = vmatpush.xpose.msra.mxu0 0.0
    %639 = vmatpush.xpose.msra.mxu0 0.0
    %640 = vmatpush.xpose.msra.mxu0 0.0
    %641 = vmatpush.xpose.msra.mxu0 0.0
    %642 = vmatpush.xpose.msra.mxu0 0.0
    %643 = vmatpush.xpose.msra.mxu0 0.0
    %644 = vmatpush.xpose.msra.mxu0 0.0
    %645 = vmatpush.xpose.msra.mxu0 0.0
    %646 = vmatpush.xpose.msra.mxu0 0.0
    %647 = vmatpush.xpose.msra.mxu0 0.0
    %648 = vmatpush.xpose.msra.mxu0 0.0
    %649 = vmatpush.xpose.msra.mxu0 0.0
    %650 = vmatpush.xpose.msra.mxu0 0.0
    %651 = vmatpush.xpose.msra.mxu0 0.0
    %652 = vmatpush.xpose.msra.mxu0 %v636
    %653 = vmatpush.xpose.msra.mxu0 %v634
    %654 = vmatmul.f32.gmra.mxu0 %v630
    %v655 = vpop.f32.mrf.mxu0
    %v656 = vadd.f32 0.0, %v655
    %657 = vmatmul.f32.gmra.mxu0 %v632
    %v658 = vpop.f32.mrf.mxu0
    %v659 = vadd.f32 0.0, %v658
    %660 = vdwg.mxu0
    %v661 = vmul.f32 %v656, 0.35355338
    %v662 = vmul.f32 %v659, 0.35355338
    %v663 = vadd.f32 %v661, %v560
    %v664 = vadd.f32 %v662, %v560
    %v665 = vsel %vm128, %v663, -inf
    %666 = vmax.xlane.f32.xlu0 %v665
    %v667 = vpop.xlane.xlu0 %666
    %v668 = vsel %vm128, %v664, -inf
    %669 = vmax.xlane.f32.xlu0 %v668
    %v670 = vpop.xlane.xlu0 %669
    %v671 = vsub.f32 %v663, %v667
    %v672 = vsub.f32 %v664, %v670
    %v673 = vmul.f32 %v671, 1.442695
    %v674 = vpow.pop %v673
    %v675 = vmul.f32 %v672, 1.442695
    %v676 = vpow.pop %v675
    %v677 = vsel %vm128, %v674, 0.0
    %678 = vadd.xlane.f32.xlu0 %v677
    %v679 = vpop.xlane.xlu0 %678
    %v680 = vsel %vm128, %v676, 0.0
    %681 = vadd.xlane.f32.xlu0 %v680
    %v682 = vpop.xlane.xlu0 %681
    %v683 = vrcp.pop %v679
    %v684 = vrcp.pop %v682
    %v685 = vmul.f32 %v674, %v683
    %v686 = vmul.f32 %v676, %v684
    %687 = vrot.lane.b32.xlu0 %v79, 56
    %v688 = vpop.permute.xlu0 %687
    %689 = vrot.lane.b32.xlu0 %v82, 56
    %v690 = vpop.permute.xlu0 %689
    %v694 = vsel %vm128, %v685, 0
    %v697 = vsel %vm128, %v686, 0
    %699 = vmatpush.msra.mxu0 0.0
    %700 = vmatpush.msra.mxu0 0.0
    %701 = vmatpush.msra.mxu0 0.0
    %702 = vmatpush.msra.mxu0 0.0
    %703 = vmatpush.msra.mxu0 0.0
    %704 = vmatpush.msra.mxu0 0.0
    %705 = vmatpush.msra.mxu0 0.0
    %706 = vmatpush.msra.mxu0 0.0
    %707 = vmatpush.msra.mxu0 0.0
    %708 = vmatpush.msra.mxu0 0.0
    %709 = vmatpush.msra.mxu0 0.0
    %710 = vmatpush.msra.mxu0 0.0
    %711 = vmatpush.msra.mxu0 0.0
    %712 = vmatpush.msra.mxu0 0.0
    %713 = vmatpush.msra.mxu0 %v690
    %714 = vmatpush.msra.mxu0 %v688
    %715 = vmatmul.f32.gmra.mxu0 %v694
    %v716 = vpop.f32.mrf.mxu0
    %v717 = vadd.f32 0.0, %v716
    %718 = vmatmul.f32.gmra.mxu0 %v697
    %v719 = vpop.f32.mrf.mxu0
    %v720 = vadd.f32 0.0, %v719
    %721 = vdwg.mxu0
    %724 = vrot.lane.b32.xlu0 %v717, 8
    %v725 = vpop.permute.xlu0 %724
    %726 = vrot.lane.b32.xlu0 %v720, 8
    %v727 = vpop.permute.xlu0 %726
    %730 = vst.msk [vmem:[#allocation2 + $0x10] sm:$0xff] %vm296, %v725
    %731 = vst.msk [vmem:[#allocation2 + $0x18] sm:$0xff] %vm296, %v727
    %732 = vrot.lane.b32.xlu0 %v79, 112
    %v733 = vpop.permute.xlu0 %732
    %734 = vrot.lane.b32.xlu0 %v82, 112
    %v735 = vpop.permute.xlu0 %734
    %736 = vrot.lane.b32.xlu0 %v79, 80
    %v737 = vpop.permute.xlu0 %736
    %738 = vrot.lane.b32.xlu0 %v82, 80
    %v739 = vpop.permute.xlu0 %738
    %v740 = vsel %vm91, %v733, 0
    %v742 = vsel %vm91, %v735, 0
    %v744 = vsel %vm91, %v737, 0
    %v746 = vsel %vm91, %v739, 0
    %748 = vmatpush.xpose.msra.mxu0 0.0
    %749 = vmatpush.xpose.msra.mxu0 0.0
    %750 = vmatpush.xpose.msra.mxu0 0.0
    %751 = vmatpush.xpose.msra.mxu0 0.0
    %752 = vmatpush.xpose.msra.mxu0 0.0
    %753 = vmatpush.xpose.msra.mxu0 0.0
    %754 = vmatpush.xpose.msra.mxu0 0.0
    %755 = vmatpush.xpose.msra.mxu0 0.0
    %756 = vmatpush.xpose.msra.mxu0 0.0
    %757 = vmatpush.xpose.msra.mxu0 0.0
    %758 = vmatpush.xpose.msra.mxu0 0.0
    %759 = vmatpush.xpose.msra.mxu0 0.0
    %760 = vmatpush.xpose.msra.mxu0 0.0
    %761 = vmatpush.xpose.msra.mxu0 0.0
    %762 = vmatpush.xpose.msra.mxu0 %v746
    %763 = vmatpush.xpose.msra.mxu0 %v744
    %764 = vmatmul.f32.gmra.mxu0 %v740
    %v765 = vpop.f32.mrf.mxu0
    %v766 = vadd.f32 0.0, %v765
    %767 = vmatmul.f32.gmra.mxu0 %v742
    %v768 = vpop.f32.mrf.mxu0
    %v769 = vadd.f32 0.0, %v768
    %770 = vdwg.mxu0
    %v771 = vmul.f32 %v766, 0.35355338
    %v772 = vmul.f32 %v769, 0.35355338
    %v773 = vadd.f32 %v771, %v560
    %v774 = vadd.f32 %v772, %v560
    %v775 = vsel %vm128, %v773, -inf
    %776 = vmax.xlane.f32.xlu0 %v775
    %v777 = vpop.xlane.xlu0 %776
    %v778 = vsel %vm128, %v774, -inf
    %779 = vmax.xlane.f32.xlu0 %v778
    %v780 = vpop.xlane.xlu0 %779
    %v781 = vsub.f32 %v773, %v777
    %v782 = vsub.f32 %v774, %v780
    %v783 = vmul.f32 %v781, 1.442695
    %v784 = vpow.pop %v783
    %v785 = vmul.f32 %v782, 1.442695
    %v786 = vpow.pop %v785
    %v787 = vsel %vm128, %v784, 0.0
    %788 = vadd.xlane.f32.xlu0 %v787
    %v789 = vpop.xlane.xlu0 %788
    %v790 = vsel %vm128, %v786, 0.0
    %791 = vadd.xlane.f32.xlu0 %v790
    %v792 = vpop.xlane.xlu0 %791
    %v793 = vrcp.pop %v789
    %v794 = vrcp.pop %v792
    %v795 = vmul.f32 %v784, %v793
    %v796 = vmul.f32 %v786, %v794
    %797 = vrot.lane.b32.xlu0 %v79, 48
    %v798 = vpop.permute.xlu0 %797
    %799 = vrot.lane.b32.xlu0 %v82, 48
    %v800 = vpop.permute.xlu0 %799
    %v804 = vsel %vm128, %v795, 0
    %v807 = vsel %vm128, %v796, 0
    %809 = vmatpush.msra.mxu0 0.0
    %810 = vmatpush.msra.mxu0 0.0
    %811 = vmatpush.msra.mxu0 0.0
    %812 = vmatpush.msra.mxu0 0.0
    %813 = vmatpush.msra.mxu0 0.0
    %814 = vmatpush.msra.mxu0 0.0
    %815 = vmatpush.msra.mxu0 0.0
    %816 = vmatpush.msra.mxu0 0.0
    %817 = vmatpush.msra.mxu0 0.0
    %818 = vmatpush.msra.mxu0 0.0
    %819 = vmatpush.msra.mxu0 0.0
    %820 = vmatpush.msra.mxu0 0.0
    %821 = vmatpush.msra.mxu0 0.0
    %822 = vmatpush.msra.mxu0 0.0
    %823 = vmatpush.msra.mxu0 %v800
    %824 = vmatpush.msra.mxu0 %v798
    %825 = vmatmul.f32.gmra.mxu0 %v804
    %v826 = vpop.f32.mrf.mxu0
    %v827 = vadd.f32 0.0, %v826
    %828 = vmatmul.f32.gmra.mxu0 %v807
    %v829 = vpop.f32.mrf.mxu0
    %v830 = vadd.f32 0.0, %v829
    %831 = vdwg.mxu0
    %834 = vrot.lane.b32.xlu0 %v827, 16
    %v835 = vpop.permute.xlu0 %834
    %836 = vrot.lane.b32.xlu0 %v830, 16
    %v837 = vpop.permute.xlu0 %836
    %840 = vst.msk [vmem:[#allocation2 + $0x10] sm:$0xff] %vm407, %v835
    %841 = vst.msk [vmem:[#allocation2 + $0x18] sm:$0xff] %vm407, %v837
    %842 = vrot.lane.b32.xlu0 %v79, 104
    %v843 = vpop.permute.xlu0 %842
    %844 = vrot.lane.b32.xlu0 %v82, 104
    %v845 = vpop.permute.xlu0 %844
    %846 = vrot.lane.b32.xlu0 %v79, 72
    %v847 = vpop.permute.xlu0 %846
    %848 = vrot.lane.b32.xlu0 %v82, 72
    %v849 = vpop.permute.xlu0 %848
    %v850 = vsel %vm91, %v843, 0
    %v852 = vsel %vm91, %v845, 0
    %v854 = vsel %vm91, %v847, 0
    %v856 = vsel %vm91, %v849, 0
    %858 = vmatpush.xpose.msra.mxu0 0.0
    %859 = vmatpush.xpose.msra.mxu0 0.0
    %860 = vmatpush.xpose.msra.mxu0 0.0
    %861 = vmatpush.xpose.msra.mxu0 0.0
    %862 = vmatpush.xpose.msra.mxu0 0.0
    %863 = vmatpush.xpose.msra.mxu0 0.0
    %864 = vmatpush.xpose.msra.mxu0 0.0
    %865 = vmatpush.xpose.msra.mxu0 0.0
    %866 = vmatpush.xpose.msra.mxu0 0.0
    %867 = vmatpush.xpose.msra.mxu0 0.0
    %868 = vmatpush.xpose.msra.mxu0 0.0
    %869 = vmatpush.xpose.msra.mxu0 0.0
    %870 = vmatpush.xpose.msra.mxu0 0.0
    %871 = vmatpush.xpose.msra.mxu0 0.0
    %872 = vmatpush.xpose.msra.mxu0 %v856
    %873 = vmatpush.xpose.msra.mxu0 %v854
    %874 = vmatmul.f32.gmra.mxu0 %v850
    %v875 = vpop.f32.mrf.mxu0
    %v876 = vadd.f32 0.0, %v875
    %877 = vmatmul.f32.gmra.mxu0 %v852
    %v878 = vpop.f32.mrf.mxu0
    %v879 = vadd.f32 0.0, %v878
    %880 = vdwg.mxu0
    %v881 = vmul.f32 %v876, 0.35355338
    %v882 = vmul.f32 %v879, 0.35355338
    %v883 = vadd.f32 %v881, %v560
    %v884 = vadd.f32 %v882, %v560
    %v885 = vsel %vm128, %v883, -inf
    %886 = vmax.xlane.f32.xlu0 %v885
    %v887 = vpop.xlane.xlu0 %886
    %v888 = vsel %vm128, %v884, -inf
    %889 = vmax.xlane.f32.xlu0 %v888
    %v890 = vpop.xlane.xlu0 %889
    %v891 = vsub.f32 %v883, %v887
    %v892 = vsub.f32 %v884, %v890
    %v893 = vmul.f32 %v891, 1.442695
    %v894 = vpow.pop %v893
    %v895 = vmul.f32 %v892, 1.442695
    %v896 = vpow.pop %v895
    %v897 = vsel %vm128, %v894, 0.0
    %898 = vadd.xlane.f32.xlu0 %v897
    %v899 = vpop.xlane.xlu0 %898
    %v900 = vsel %vm128, %v896, 0.0
    %901 = vadd.xlane.f32.xlu0 %v900
    %v902 = vpop.xlane.xlu0 %901
    %v903 = vrcp.pop %v899
    %v904 = vrcp.pop %v902
    %v905 = vmul.f32 %v894, %v903
    %v906 = vmul.f32 %v896, %v904
    %907 = vrot.lane.b32.xlu0 %v79, 40
    %v908 = vpop.permute.xlu0 %907
    %909 = vrot.lane.b32.xlu0 %v82, 40
    %v910 = vpop.permute.xlu0 %909
    %v914 = vsel %vm128, %v905, 0
    %v917 = vsel %vm128, %v906, 0
    %919 = vmatpush.msra.mxu0 0.0
    %920 = vmatpush.msra.mxu0 0.0
    %921 = vmatpush.msra.mxu0 0.0
    %922 = vmatpush.msra.mxu0 0.0
    %923 = vmatpush.msra.mxu0 0.0
    %924 = vmatpush.msra.mxu0 0.0
    %925 = vmatpush.msra.mxu0 0.0
    %926 = vmatpush.msra.mxu0 0.0
    %927 = vmatpush.msra.mxu0 0.0
    %928 = vmatpush.msra.mxu0 0.0
    %929 = vmatpush.msra.mxu0 0.0
    %930 = vmatpush.msra.mxu0 0.0
    %931 = vmatpush.msra.mxu0 0.0
    %932 = vmatpush.msra.mxu0 0.0
    %933 = vmatpush.msra.mxu0 %v910
    %934 = vmatpush.msra.mxu0 %v908
    %935 = vmatmul.f32.gmra.mxu0 %v914
    %v936 = vpop.f32.mrf.mxu0
    %v937 = vadd.f32 0.0, %v936
    %938 = vmatmul.f32.gmra.mxu0 %v917
    %v939 = vpop.f32.mrf.mxu0
    %v940 = vadd.f32 0.0, %v939
    %941 = vdwg.mxu0
    %944 = vrot.lane.b32.xlu0 %v937, 24
    %v945 = vpop.permute.xlu0 %944
    %946 = vrot.lane.b32.xlu0 %v940, 24
    %v947 = vpop.permute.xlu0 %946
    %950 = vst.msk [vmem:[#allocation2 + $0x10] sm:$0xff] %vm518, %v945
    %951 = vst.msk [vmem:[#allocation2 + $0x18] sm:$0xff] %vm518, %v947
    %v952 = vld [vmem:[#allocation2] sm:$0xff]
    %v953 = vld [vmem:[#allocation2 + $0x8] sm:$0xff]
    %v954 = vld [vmem:[#allocation2 + $0x10] sm:$0xff]
    %v955 = vld [vmem:[#allocation2 + $0x18] sm:$0xff]
    %v956 = vld [vmem:[%s3] sm:$0xff]
    %v957 = vld [vmem:[%s3 + $0x8] sm:$0xff]
    %v958 = vld [vmem:[%s3 + $0x10] sm:$0xff]
    %v959 = vld [vmem:[%s3 + $0x18] sm:$0xff]
    %v960 = vld [vmem:[%s4] sm:$0x1]
    %v962 = vperm.slane %v960, 0
    %v965 = vsel %vm42, %v952, 0
    %v968 = vsel %vm42, %v953, 0
    %v971 = vsel %vm42, %v954, 0
    %v974 = vsel %vm42, %v955, 0
    %976 = vmatpush.msra.mxu0 0.0
    %977 = vmatpush.msra.mxu0 0.0
    %978 = vmatpush.msra.mxu0 0.0
    %979 = vmatpush.msra.mxu0 0.0
    %980 = vmatpush.msra.mxu0 0.0
    %981 = vmatpush.msra.mxu0 0.0
    %982 = vmatpush.msra.mxu0 0.0
    %983 = vmatpush.msra.mxu0 0.0
    %984 = vmatpush.msra.mxu0 0.0
    %985 = vmatpush.msra.mxu0 0.0
    %986 = vmatpush.msra.mxu0 0.0
    %987 = vmatpush.msra.mxu0 0.0
    %988 = vmatpush.msra.mxu0 %v959
    %989 = vmatpush.msra.mxu0 %v958
    %990 = vmatpush.msra.mxu0 %v957
    %991 = vmatpush.msra.mxu0 %v956
    %992 = vmatmul.f32.gmra.mxu0 %v965
    %v993 = vpop.f32.mrf.mxu0
    %v994 = vadd.f32 %v962, %v993
    %995 = vmatmul.f32.gmra.mxu0 %v968
    %v996 = vpop.f32.mrf.mxu0
    %v997 = vadd.f32 %v962, %v996
    %998 = vmatmul.f32.gmra.mxu0 %v971
    %v999 = vpop.f32.mrf.mxu0
    %v1000 = vadd.f32 %v962, %v999
    %1001 = vmatmul.f32.gmra.mxu0 %v974
    %v1002 = vpop.f32.mrf.mxu0
    %v1003 = vadd.f32 %v962, %v1002
    %1004 = vdwg.mxu0
    %v1005 = vadd.f32 %v994, %v30
    %v1006 = vadd.f32 %v997, %v31
    %v1007 = vadd.f32 %v1000, %v32
    %v1008 = vadd.f32 %v1003, %v33
    %v1009 = vsel %vm42, %v1005, 0.0
    %1010 = vadd.xlane.f32.xlu0 %v1009
    %v1011 = vpop.xlane.xlu0 %1010
    %v1012 = vsel %vm42, %v1006, 0.0
    %1013 = vadd.xlane.f32.xlu0 %v1012
    %v1014 = vpop.xlane.xlu0 %1013
    %v1015 = vsel %vm42, %v1007, 0.0
    %1016 = vadd.xlane.f32.xlu0 %v1015
    %v1017 = vpop.xlane.xlu0 %1016
    %v1018 = vsel %vm42, %v1008, 0.0
    %1019 = vadd.xlane.f32.xlu0 %v1018
    %v1020 = vpop.xlane.xlu0 %1019
    %v1021 = vrcp.pop 32.0
    %v1022 = vmul.f32 32.0, %v1021
    %v1023 = vsub.f32 1.0, %v1022
    %v1024 = vmul.f32 %v1021, %v1023
    %v1025 = vadd.f32 %v1021, %v1024
    %vm1026 = vweird.f32 %v1021
    %v1027 = vsel %vm1026, %v1021, %v1025
    %v1028 = vmul.f32 %v1011, %v1027
    %v1029 = vmul.f32 %v1014, %v1027
    %v1030 = vmul.f32 %v1017, %v1027
    %v1031 = vmul.f32 %v1020, %v1027
    %v1032 = vsub.f32 %v1005, %v1028
    %v1033 = vsub.f32 %v1006, %v1029
    %v1034 = vsub.f32 %v1007, %v1030
    %v1035 = vsub.f32 %v1008, %v1031
    %v1036 = vmul.f32 %v1032, %v1032
    %v1037 = vmul.f32 %v1033, %v1033
    %v1038 = vmul.f32 %v1034, %v1034
    %v1039 = vmul.f32 %v1035, %v1035
    %v1040 = vsel %vm42, %v1036, 0.0
    %1041 = vadd.xlane.f32.xlu0 %v1040
    %v1042 = vpop.xlane.xlu0 %1041
    %v1043 = vsel %vm42, %v1037, 0.0
    %1044 = vadd.xlane.f32.xlu0 %v1043
    %v1045 = vpop.xlane.xlu0 %1044
    %v1046 = vsel %vm42, %v1038, 0.0
    %1047 = vadd.xlane.f32.xlu0 %v1046
    %v1048 = vpop.xlane.xlu0 %1047
    %v1049 = vsel %vm42, %v1039, 0.0
    %1050 = vadd.xlane.f32.xlu0 %v1049
    %v1051 = vpop.xlane.xlu0 %1050
    %v1052 = vmul.f32 %v1042, %v1027
    %v1053 = vmul.f32 %v1045, %v1027
    %v1054 = vmul.f32 %v1048, %v1027
    %v1055 = vmul.f32 %v1051, %v1027
    %v1056 = vadd.f32 %v1052, 1e-12
    %v1057 = vadd.f32 %v1053, 1e-12
    %v1058 = vadd.f32 %v1054, 1e-12
    %v1059 = vadd.f32 %v1055, 1e-12
    %v1060 = vrsqrt.pop %v1056
    %v1061 = vmul.f32 %v1060, %v1056
    %v1062 = vmul.f32 %v1061, %v1060
    %v1063 = vmul.f32 0.5, %v1062
    %v1064 = vsub.f32 1.5, %v1063
    %v1065 = vmul.f32 %v1060, %v1064
    %vm1066 = vweird.f32 %v1056
    %vm1067 = vweird.f32 %v1060
    %vm1068 = vmor %vm1066, %vm1067
    %v1069 = vsel %vm1068, %v1060, %v1065
    %v1070 = vrsqrt.pop %v1057
    %v1071 = vmul.f32 %v1070, %v1057
    %v1072 = vmul.f32 %v1071, %v1070
    %v1073 = vmul.f32 0.5, %v1072
    %v1074 = vsub.f32 1.5, %v1073
    %v1075 = vmul.f32 %v1070, %v1074
    %vm1076 = vweird.f32 %v1057
    %vm1077 = vweird.f32 %v1070
    %vm1078 = vmor %vm1076, %vm1077
    %v1079 = vsel %vm1078, %v1070, %v1075
    %v1080 = vrsqrt.pop %v1058
    %v1081 = vmul.f32 %v1080, %v1058
    %v1082 = vmul.f32 %v1081, %v1080
    %v1083 = vmul.f32 0.5, %v1082
    %v1084 = vsub.f32 1.5, %v1083
    %v1085 = vmul.f32 %v1080, %v1084
    %vm1086 = vweird.f32 %v1058
    %vm1087 = vweird.f32 %v1080
    %vm1088 = vmor %vm1086, %vm1087
    %v1089 = vsel %vm1088, %v1080, %v1085
    %v1090 = vrsqrt.pop %v1059
    %v1091 = vmul.f32 %v1090, %v1059
    %v1092 = vmul.f32 %v1091, %v1090
    %v1093 = vmul.f32 0.5, %v1092
    %v1094 = vsub.f32 1.5, %v1093
    %v1095 = vmul.f32 %v1090, %v1094
    %vm1096 = vweird.f32 %v1059
    %vm1097 = vweird.f32 %v1090
    %vm1098 = vmor %vm1096, %vm1097
    %v1099 = vsel %vm1098, %v1090, %v1095
    %v1100 = vmul.f32 %v1032, %v1069
    %v1101 = vmul.f32 %v1033, %v1079
    %v1102 = vmul.f32 %v1034, %v1089
    %v1103 = vmul.f32 %v1035, %v1099
    %v1104 = vld [vmem:[%s5] sm:$0x1]
    %v1106 = vperm.slane %v1104, 0
    %v1108 = vmul.f32 %v1100, %v1106
    %v1109 = vmul.f32 %v1101, %v1106
    %v1110 = vmul.f32 %v1102, %v1106
    %v1111 = vmul.f32 %v1103, %v1106
    %v1112 = vld [vmem:[%s6] sm:$0x1]
    %v1114 = vperm.slane %v1112, 0
    %v1116 = vadd.f32 %v1108, %v1114
    %v1117 = vadd.f32 %v1109, %v1114
    %v1118 = vadd.f32 %v1110, %v1114
    %v1119 = vadd.f32 %v1111, %v1114
    %1120 = vst.msk [vmem:[#allocation3] sm:$0xff] %vm42, %v1116
    %1121 = vst.msk [vmem:[#allocation3 + $0x8] sm:$0xff] %vm42, %v1117
    %1122 = vst.msk [vmem:[#allocation3 + $0x10] sm:$0xff] %vm42, %v1118
    %1123 = vst.msk [vmem:[#allocation3 + $0x18] sm:$0xff] %vm42, %v1119
    // Predicated region
    $region34: #{bert_attention_forward.1} parent=1 // pred_check
      _
    $region35: #{bert_attention_forward.1} parent=1 // pred_check_branch
      %1125 = sbr.rel (0) target = $region37
    $region36: #{bert_attention_forward.1} parent=1 // pred_region
      %1127 = vsyncadd [#allocation4], 0
      %s1128 = sshll.u32 [#allocation3], 4
      %s1129 = int_to_ptr.vmem [resolvable:$true] %s1128
      %s1130 = sshll.u32 %s8, 4
      %s1131 = int_to_ptr.hbm [resolvable:$true] %s1130
      %1136 = dma.vmem_to_hbm [thread:$0]  %s1129, 512, %s1131, [#allocation4], 128, 128, 8
    $region37: #{bert_attention_forward.1} parent=1 // pred_fallthru
      _
    // Predicated region
    $region38: #{bert_attention_forward.1} parent=1 // pred_check
      _
    $region39: #{bert_attention_forward.1} parent=1 // pred_check_branch
      %1138 = sbr.rel (0) target = $region41
    $region40: #{bert_attention_forward.1} parent=1 // pred_region
      %1140 = dma.done [#allocation4], 512
    $region41: #{bert_attention_forward.1} parent=1 // pred_fallthru
      _
    %1141 = vsyncpa [#allocation4], 1

</llo_original>
